<compile_context>
chip_gen: v7x
topology: tpu7x:2x2x1
jax: 0.10.0
libtpu: 0.0.40
codegen_flags: <defaults>
</compile_context>

<pallas_src>
import functools

import jax
import jax.numpy as jnp
import numpy as np
from jax.experimental import pallas as pl
from jax.experimental.pallas import tpu as pltpu


def _attention_kernel(style_idx_ref,            # SMEM scalar prefetch, (B,) int32
                      x_ref, wqkv_ref,          # VMEM: (C+1, HW), (CP, C+1)
                      gamma_ref,                # SMEM scalar, (1,) f32
                      o_ref,                    # VMEM output: (C, HW)
                      attn_scr,                 # VMEM scratch: (HW, HW) bf16
                      *, c, cq, hw, num_styles):
    b = pl.program_id(0)
    xa = x_ref[...]                             # (C+1, HW); last row is the ones/bias row
    x = xa[0:c, :]                              # (C, HW) residual input

    # Fused q|k|v 1x1-conv projections, bias folded into the contraction (K = C+1).
    qkv = jnp.dot(wqkv_ref[...], xa, preferred_element_type=jnp.float32)   # (CP, HW)
    q = qkv[0:cq, :]                            # (Cq, HW)
    k = qkv[cq:2 * cq, :]                       # (Cq, HW)
    v = qkv[2 * cq:, :]                         # (C,  HW)

    # Transposed score layout: keys on sublanes, queries on lanes.
    #   scores_t[j, i] = sum_c k[c, j] * q[c, i]   (== torch scores[i, j])
    # Only the tiny (Cq, HW) operands sit in a non-standard contraction; the big
    # (HW, HW) tensor is an output here and the plain (K, N) operand below, so no
    # (HW, HW) transpose can be introduced on the MXU path.
    scores_t = jax.lax.dot_general(k, q, (((0,), (0,)), ((), ())),
                                   preferred_element_type=jnp.float32)     # (HW, HW)

    # Softmax over keys (axis 0), with the num_styles scale folded into the
    # (exact) normalizer — a (1, HW) reciprocal's worth of work.
    s_max = jnp.max(scores_t, axis=0, keepdims=True)                       # (1, HW)
    e = jnp.exp(scores_t - s_max)
    inv = jnp.float32(num_styles) / jnp.sum(e, axis=0, keepdims=True)      # (1, HW)
    attn_t = e * inv                                                       # (HW, HW) f32

    # Stage attention weights as bf16 so the attended matmul runs with bf16
    # operands (f32 accumulation): 3x MXU throughput, half the scratch traffic.
    attn_bf = attn_t.astype(jnp.bfloat16)
    attn_scr[...] = attn_bf
    v_bf = v.astype(jnp.bfloat16)

    # attended[c, i] = sum_j v[c, j] * attn_t[j, i]  — standard (M,K)@(K,N).
    attended = jnp.dot(v_bf, attn_scr[...],
                       preferred_element_type=jnp.float32)                 # (C, HW)

    gamma = gamma_ref[0]
    out = gamma * attended + x
    o_ref[...] = out

    # Style mask: torch's scatter_ zeroes ONLY attention_weights[b, 0, sidx],
    # i.e. it only changes output column i == 0. Apply it as a rank-1 fixup of
    # that column, off the matmul's critical path (no second write of the attn
    # scratch, no full-size where). bf16-rounded a0/vc cancel exactly the term
    # the MXU accumulated.
    sidx = style_idx_ref[b]
    row_ids = jax.lax.broadcasted_iota(jnp.int32, (hw, 1), 0)   # key index on sublanes
    col_ids = jax.lax.broadcasted_iota(jnp.int32, (1, hw), 1)   # key index on lanes
    a0 = jnp.sum(jnp.where(row_ids == sidx,
                           attn_bf[:, 0:1].astype(jnp.float32), 0.0),
                 keepdims=True)                                 # (1,1) = attn_t[sidx, 0]
    vc = jnp.sum(jnp.where(col_ids == sidx,
                           v_bf.astype(jnp.float32), 0.0),
                 axis=1, keepdims=True)                         # (C,1) = v[:, sidx]
    o_ref[:, 0:1] = out[:, 0:1] - gamma * (a0 * vc)


def attention_block(x, style_idx, Wq, bq, Wk, bk, Wv, bv, gamma, num_styles):
    B, C, H, W = x.shape
    HW = H * W
    Cq = Wq.shape[0]
    assert num_styles == HW, "torch's implicit broadcast requires num_styles == H*W"

    xf = x.reshape(B, C, HW).astype(jnp.float32)
    # Bias folding: ones row on x, bias column on the stacked weights.
    x_aug = jnp.concatenate([xf, jnp.ones((B, 1, HW), jnp.float32)], axis=1)   # (B, C+1, HW)
    Wqkv = jnp.concatenate([Wq, Wk, Wv], axis=0).astype(jnp.float32)           # (CP, C)
    bqkv = jnp.concatenate([bq, bk, bv], axis=0).astype(jnp.float32)           # (CP, 1)
    Wqkv_aug = jnp.concatenate([Wqkv, bqkv], axis=1)                           # (CP, C+1)
    CP = 2 * Cq + C

    kernel = functools.partial(_attention_kernel, c=C, cq=Cq, hw=HW,
                               num_styles=num_styles)

    out = pl.pallas_call(
        kernel,
        out_shape=jax.ShapeDtypeStruct((B, C, HW), jnp.float32),
        grid_spec=pltpu.PrefetchScalarGridSpec(
            num_scalar_prefetch=1,                    # style_idx -> SMEM
            grid=(B,),
            in_specs=[
                pl.BlockSpec((pl.Squeezed(), C + 1, HW), lambda b, s: (b, 0, 0)),  # x (+ones)
                pl.BlockSpec((CP, C + 1),                lambda b, s: (0, 0)),     # [Wq;Wk;Wv | b]
                pl.BlockSpec(memory_space=pltpu.MemorySpace.SMEM),                 # gamma scalar
            ],
            out_specs=pl.BlockSpec((pl.Squeezed(), C, HW), lambda b, s: (b, 0, 0)),
            scratch_shapes=[pltpu.VMEM((HW, HW), jnp.bfloat16)],
        ),
        compiler_params=pltpu.CompilerParams(dimension_semantics=("parallel",)),
    )(style_idx.astype(jnp.int32), x_aug, Wqkv_aug,
      gamma.reshape(1).astype(jnp.float32))

    return out.reshape(B, C, H, W)


def reference(x, style_idx, Wq, bq, Wk, bk, Wv, bv, gamma, num_styles):
    """Plain-JAX mirror of the torch forward (bf16 attended matmul, like the kernel)."""
    B, C, H, W = x.shape
    HW = H * W
    xf = x.reshape(B, C, HW)
    q = jnp.einsum('oc,bcn->bon', Wq, xf) + bq[None]
    k = jnp.einsum('oc,bcn->bon', Wk, xf) + bk[None]
    v = jnp.einsum('oc,bcn->bon', Wv, xf) + bv[None]
    scores = jnp.einsum('bci,bcj->bij', q, k)
    attn = jax.nn.softmax(scores, axis=-1)
    sw = jnp.full((B, HW, num_styles), float(num_styles), jnp.float32)
    sw = sw.at[jnp.arange(B), 0, style_idx].set(0.0)   # scatter_ touches only row 0
    attn = attn * sw
    # Mirror the kernel's bf16-operand / f32-accumulate attended matmul.
    attended = jnp.einsum('bcj,bij->bci',
                          v.astype(jnp.bfloat16), attn.astype(jnp.bfloat16),
                          preferred_element_type=jnp.float32)
    out = gamma.reshape(()) * attended + xf
    return out.reshape(B, C, H, W)


if __name__ == "__main__":
    B, C, H, W = 2, 32, 16, 16
    HW = H * W                       # 256 — lane-dense (multiple of 128)
    num_styles = HW                  # required for torch's implicit broadcast
    Cq = C // 8                      # 4

    key = jax.random.PRNGKey(0)
    ks = jax.random.split(key, 8)
    x = jax.random.normal(ks[0], (B, C, H, W), jnp.float32)
    Wq = 0.1 * jax.random.normal(ks[1], (Cq, C), jnp.float32)
    bq = 0.1 * jax.random.normal(ks[2], (Cq, 1), jnp.float32)
    Wk = 0.1 * jax.random.normal(ks[3], (Cq, C), jnp.float32)
    bk = 0.1 * jax.random.normal(ks[4], (Cq, 1), jnp.float32)
    Wv = 0.1 * jax.random.normal(ks[5], (C, C), jnp.float32)
    bv = 0.1 * jax.random.normal(ks[6], (C, 1), jnp.float32)
    gamma = jnp.full((1,), 0.5, jnp.float32)   # torch init is 0 (identity); nonzero to exercise path
    style_idx = jnp.array([3, 117], dtype=jnp.int32)   # must be < H*W (torch would raise otherwise)

    out = attention_block(x, style_idx, Wq, bq, Wk, bk, Wv, bv, gamma, num_styles)
    out = jax.block_until_ready(out)

    ref = reference(x, style_idx, Wq, bq, Wk, bk, Wv, bv, gamma, num_styles)
    # Reference mirrors the bf16 attended matmul, so residual differences are only
    # rounding-order / occasional 1-ulp bf16 flips of attention weights.
    np.testing.assert_allclose(np.asarray(out), np.asarray(ref), rtol=1e-2, atol=1e-2)

    print("KERNEL_OK")
</pallas_src>

<mosaic_0001>
module attributes {stable_mosaic.version = 11 : i64} {
  func.func @_attention_kernel(%arg0: i32, %arg1: memref<2xi32, #tpu.memory_space<smem>>, %arg2: memref<1x33x256xf32, #tpu.memory_space<vmem>>, %arg3: memref<40x33xf32, #tpu.memory_space<vmem>>, %arg4: memref<1xf32, #tpu.memory_space<smem>>, %arg5: memref<1x32x256xf32, #tpu.memory_space<vmem>>, %arg6: memref<256x256xbf16, #tpu.memory_space<vmem>>) attributes {dimension_semantics = [#tpu.dimension_semantics<parallel>], iteration_bounds = array<i64: 2>, scalar_prefetch = 1 : i64, scratch_operands = 1 : i64, tpu.core_type = #tpu.core_type<tc>, window_params = [{transform_indices = @transform_0, window_bounds = array<i64: 1, 33, 256>}, {pipeline_mode = #tpu.pipeline_mode<synchronous>, transform_indices = @transform_1, window_bounds = array<i64: 40, 33>}, {transform_indices = @transform_2, window_bounds = array<i64: 1>}, {transform_indices = @transform_3, window_bounds = array<i64: 1, 32, 256>}]} {
    %c0 = arith.constant 0 : index
    %c0_0 = arith.constant 0 : index
    %c0_1 = arith.constant 0 : index
    %0 = vector.load %arg2[%c0, %c0_0, %c0_1] : memref<1x33x256xf32, #tpu.memory_space<vmem>>, vector<1x33x256xf32>
    %1 = vector.shape_cast %0 : vector<1x33x256xf32> to vector<33x256xf32>
    %2 = vector.extract_strided_slice %1 {offsets = [0, 0], sizes = [32, 256], strides = [1, 1]} : vector<33x256xf32> to vector<32x256xf32>
    %c0_2 = arith.constant 0 : index
    %c0_3 = arith.constant 0 : index
    %3 = vector.load %arg3[%c0_2, %c0_3] : memref<40x33xf32, #tpu.memory_space<vmem>>, vector<40x33xf32>
    %cst = arith.constant dense<0.000000e+00> : vector<40x256xf32>
    %4 = tpu.matmul %3, %1, %cst {dimension_numbers = #tpu.dot_dimension_numbers<[1], [0], [0], [1], [0, 0, 1, 1], [], []>} : vector<40x33xf32>, vector<33x256xf32>, vector<40x256xf32> -> vector<40x256xf32>
    %5 = vector.extract_strided_slice %4 {offsets = [0, 0], sizes = [4, 256], strides = [1, 1]} : vector<40x256xf32> to vector<4x256xf32>
    %6 = vector.extract_strided_slice %4 {offsets = [4, 0], sizes = [4, 256], strides = [1, 1]} : vector<40x256xf32> to vector<4x256xf32>
    %7 = vector.extract_strided_slice %4 {offsets = [8, 0], sizes = [32, 256], strides = [1, 1]} : vector<40x256xf32> to vector<32x256xf32>
    %cst_4 = arith.constant dense<0.000000e+00> : vector<256x256xf32>
    %8 = tpu.matmul %6, %5, %cst_4 {dimension_numbers = #tpu.dot_dimension_numbers<[0], [0], [1], [1], [0, 1, 1, 1], [], []>} : vector<4x256xf32>, vector<4x256xf32>, vector<256x256xf32> -> vector<256x256xf32>
    %cst_5 = arith.constant dense<0xFF800000> : vector<256xf32>
    %9 = vector.multi_reduction <maximumf>, %8, %cst_5 [0] : vector<256x256xf32> to vector<256xf32>
    %10 = vector.shape_cast %9 : vector<256xf32> to vector<1x256xf32>
    %11 = vector.broadcast %10 : vector<1x256xf32> to vector<256x256xf32>
    %12 = arith.subf %8, %11 : vector<256x256xf32>
    %13 = math.exp %12 : vector<256x256xf32>
    %cst_6 = arith.constant dense<0.000000e+00> : vector<256xf32>
    %14 = vector.multi_reduction <add>, %13, %cst_6 [0] : vector<256x256xf32> to vector<256xf32>
    %15 = vector.shape_cast %14 : vector<256xf32> to vector<1x256xf32>
    %cst_7 = arith.constant 2.560000e+02 : f32
    %16 = vector.broadcast %cst_7 : f32 to vector<1x256xf32>
    %17 = arith.divf %16, %15 : vector<1x256xf32>
    %18 = vector.broadcast %17 : vector<1x256xf32> to vector<256x256xf32>
    %19 = arith.mulf %13, %18 : vector<256x256xf32>
    %20 = arith.truncf %19 : vector<256x256xf32> to vector<256x256xbf16>
    %c0_8 = arith.constant 0 : index
    %c0_9 = arith.constant 0 : index
    %21 = vector.load %arg6[%c0_8, %c0_9] : memref<256x256xbf16, #tpu.memory_space<vmem>>, vector<256x256xbf16>
    tpu.vector_store %arg6[%c0_8, %c0_9], %20 {strides = array<i32>} : memref<256x256xbf16, #tpu.memory_space<vmem>>, vector<256x256xbf16>,
    %22 = arith.truncf %7 : vector<32x256xf32> to vector<32x256xbf16>
    %c0_10 = arith.constant 0 : index
    %c0_11 = arith.constant 0 : index
    %23 = vector.load %arg6[%c0_10, %c0_11] : memref<256x256xbf16, #tpu.memory_space<vmem>>, vector<256x256xbf16>
    %cst_12 = arith.constant dense<0.000000e+00> : vector<32x256xf32>
    %24 = tpu.matmul %22, %23, %cst_12 {dimension_numbers = #tpu.dot_dimension_numbers<[1], [0], [0], [1], [0, 0, 1, 1], [], []>} : vector<32x256xbf16>, vector<256x256xbf16>, vector<32x256xf32> -> vector<32x256xf32>
    %c0_13 = arith.constant 0 : index
    %25 = memref.load %arg4[%c0_13] : memref<1xf32, #tpu.memory_space<smem>>
    %26 = vector.broadcast %25 : f32 to vector<32x256xf32>
    %27 = arith.mulf %26, %24 : vector<32x256xf32>
    %28 = arith.addf %27, %2 : vector<32x256xf32>
    %c0_14 = arith.constant 0 : index
    %c0_15 = arith.constant 0 : index
    %c0_16 = arith.constant 0 : index
    %29 = vector.load %arg5[%c0_14, %c0_15, %c0_16] : memref<1x32x256xf32, #tpu.memory_space<vmem>>, vector<1x32x256xf32>
    %30 = vector.shape_cast %29 : vector<1x32x256xf32> to vector<32x256xf32>
    %31 = vector.shape_cast %28 : vector<32x256xf32> to vector<1x32x256xf32>
    tpu.vector_store %arg5[%c0_14, %c0_15, %c0_16], %31 {strides = array<i32>} : memref<1x32x256xf32, #tpu.memory_space<vmem>>, vector<1x32x256xf32>,
    %32 = arith.index_cast %arg0 : i32 to index
    %33 = memref.load %arg1[%32] : memref<2xi32, #tpu.memory_space<smem>>
    %34 = tpu.iota {dimensions = array<i32: 0>} : vector<256x1xi32>
    %35 = tpu.iota {dimensions = array<i32: 1>} : vector<1x256xi32>
    %36 = vector.broadcast %33 : i32 to vector<256x1xi32>
    %37 = arith.cmpi eq, %34, %36 : vector<256x1xi32>
    %38 = vector.extract_strided_slice %20 {offsets = [0, 0], sizes = [256, 1], strides = [1, 1]} : vector<256x256xbf16> to vector<256x1xbf16>
    %39 = arith.extf %38 : vector<256x1xbf16> to vector<256x1xf32>
    %cst_17 = arith.constant 0.000000e+00 : f32
    %40 = vector.broadcast %cst_17 : f32 to vector<256x1xf32>
    %41 = arith.select %37, %39, %40 : vector<256x1xi1>, vector<256x1xf32>
    %42 = vector.shape_cast %41 : vector<256x1xf32> to vector<1x256x1xf32>
    %cst_18 = arith.constant dense<0.000000e+00> : vector<1xf32>
    %43 = vector.multi_reduction <add>, %42, %cst_18 [1, 2] : vector<1x256x1xf32> to vector<1xf32>
    %44 = vector.shape_cast %43 : vector<1xf32> to vector<1x1x1xf32>
    %45 = vector.extract %44[0, 0, 0] : f32 from vector<1x1x1xf32>
    %46 = vector.broadcast %45 : f32 to vector<1x1xf32>
    %47 = vector.broadcast %33 : i32 to vector<1x256xi32>
    %48 = arith.cmpi eq, %35, %47 : vector<1x256xi32>
    %49 = arith.extf %22 : vector<32x256xbf16> to vector<32x256xf32>
    %cst_19 = arith.constant 0.000000e+00 : f32
    %50 = vector.shape_cast %48 : vector<1x256xi1> to vector<1x256xi1>
    %51 = vector.broadcast %50 : vector<1x256xi1> to vector<32x256xi1>
    %52 = vector.broadcast %cst_19 : f32 to vector<32x256xf32>
    %53 = arith.select %51, %49, %52 : vector<32x256xi1>, vector<32x256xf32>
    %cst_20 = arith.constant dense<0.000000e+00> : vector<32xf32>
    %54 = vector.multi_reduction <add>, %53, %cst_20 [1] : vector<32x256xf32> to vector<32xf32>
    %55 = vector.shape_cast %54 : vector<32xf32> to vector<32x1xf32>
    %56 = vector.extract_strided_slice %28 {offsets = [0, 0], sizes = [32, 1], strides = [1, 1]} : vector<32x256xf32> to vector<32x1xf32>
    %57 = vector.broadcast %46 : vector<1x1xf32> to vector<32x1xf32>
    %58 = arith.mulf %57, %55 : vector<32x1xf32>
    %59 = vector.broadcast %25 : f32 to vector<32x1xf32>
    %60 = arith.mulf %59, %58 : vector<32x1xf32>
    %61 = arith.subf %56, %60 : vector<32x1xf32>
    %c0_21 = arith.constant 0 : index
    %c0_22 = arith.constant 0 : index
    %c0_23 = arith.constant 0 : index
    %62 = vector.load %arg5[%c0_21, %c0_22, %c0_23] : memref<1x32x256xf32, #tpu.memory_space<vmem>>, vector<1x32x1xf32>
    %63 = vector.shape_cast %62 : vector<1x32x1xf32> to vector<32x1xf32>
    %64 = vector.shape_cast %61 : vector<32x1xf32> to vector<1x32x1xf32>
    tpu.vector_store %arg5[%c0_21, %c0_22, %c0_23], %64 {strides = array<i32>} : memref<1x32x256xf32, #tpu.memory_space<vmem>>, vector<1x32x1xf32>,
    return
  }
  func.func @transform_0(%arg0: i32, %arg1: memref<2xi32, #tpu.memory_space<smem>>) -> (i32, i32, i32) {
    %c0_i32 = arith.constant 0 : i32
    %c0_i32_0 = arith.constant 0 : i32
    %c0_i32_1 = arith.constant 0 : i32
    return %arg0, %c0_i32, %c0_i32_0 : i32, i32, i32
  }
  func.func @transform_1(%arg0: i32, %arg1: memref<2xi32, #tpu.memory_space<smem>>) -> (i32, i32) {
    %c0_i32 = arith.constant 0 : i32
    %c0_i32_0 = arith.constant 0 : i32
    %c0_i32_1 = arith.constant 0 : i32
    return %c0_i32, %c0_i32_0 : i32, i32
  }
  func.func @transform_2(%arg0: i32, %arg1: memref<2xi32, #tpu.memory_space<smem>>) -> i32 {
    %c0_i32 = arith.constant 0 : i32
    %c0_i32_0 = arith.constant 0 : i32
    return %c0_i32 : i32
  }
  func.func @transform_3(%arg0: i32, %arg1: memref<2xi32, #tpu.memory_space<smem>>) -> (i32, i32, i32) {
    %c0_i32 = arith.constant 0 : i32
    %c0_i32_0 = arith.constant 0 : i32
    %c0_i32_1 = arith.constant 0 : i32
    return %arg0, %c0_i32, %c0_i32_0 : i32, i32, i32
  }
}

</mosaic_0001>

<llo_original>
// kernel: tpu_custom_call.1
$region0: #{tpu_custom_call.1}
  #allocation0 [shape = 'u32[]', space=smem, size = 0x4, offset = 0x4, fixed_abs, tag = 'smem constant byte address 0x4 - core index']
  #allocation1 [shape = 'u32[144,128]{1,0:T(1,128)}', space=vmem, size = 0x12000, scoped, tag = 'internal scratch']
  #allocation2 [shape = 'bf16[256,256]{1,0:T(16,128)(2,1)}', space=vmem, size = 0x20000, scoped, tag = 'scratch operand']
  #allocation3 [shape = 's32[1]{0}', space=sflag, size = 0x4, scoped, tag = 'scoped memory for tpu_custom_call.1']
  #allocation4 [shape = 'u8[512]{0}', space=smem, size = 0x200, scoped, tag = 'prefetched SMEM operand 0']
  #allocation5 [shape = 'f32[1]{0:T(128)S(6)}', space=smem, size = 0x200, scoped, tag = 'scoped memory for tpu_custom_call.1']
  %s0 = inlined_call_operand.vmem [shape: s32[2], index: 0, kind: input, shape index: {}]
  %s1 = inlined_call_operand.vmem [shape: f32[2,33,256], index: 1, kind: input, shape index: {}]
  %s2 = inlined_call_operand.vmem [shape: f32[40,33], index: 2, kind: input, shape index: {}]
  %s3 = inlined_call_operand.<no memory space> [shape: f32[1], index: 3, kind: input, shape index: {}]
  %s4 = inlined_call_operand.hbm [shape: f32[2,32,256], index: 4, kind: output, shape index: {}]
  %s5 = sld [smem:[#allocation0]]
  $region45: #{tpu_custom_call.1} parent=0
    _
  %s7 = ssub.s32 1, %s5
  %s8 = scalar_select 0, %s7, %s5
  %s9 = sshll.u32 %s0, 4
  %s10 = int_to_ptr.vmem [resolvable:$true] %s9
  %12 = dma.vmem_to_smem %s10, 16, [#allocation4], [#allocation3]
  %13 = sst [smem:[#allocation5]] %s3
  %14 = dma.done [#allocation3], 16
  %15 = sfence
  $region1: #{tpu_custom_call.1} parent=0
    #allocation6 [shape = 'u8[65536]{0}', space=vmem, size = 0x10000, scoped, tag = 'output window, operand 0']
    #allocation7 [shape = 's32[2]{0}', space=sflag, size = 0x8, scoped, tag = 'scoped memory for tpu_custom_call.1']
    %16 = vsyncpa [#allocation7], 0
    %s17 = scalar_lea.sflag [#allocation7], 1
    %18 = vsyncpa %s17, 0
    loop: start=0, step=1, limit=4
    $region2: #{tpu_custom_call.1} parent=1 // loop_pre_header
      _
    $region3: #{tpu_custom_call.1} parent=1 // loop_header
      %s20 = sphi 0, %s24
      %p21 = scmp.ge.s32.totalorder %s20, 4
      %s30 = sphi 0, %s32
      %s33 = sphi 0, %s30
      %s34 = sphi 0, %s33
      %s50 = sphi 0, %s34
      %s54 = sphi 0, %s54
      %s56 = sphi 0, %s54
      %s57 = sphi 0, %s56
      %s71 = sphi 0, %s57
      %s75 = sphi 0, %s75
      %s77 = sphi 0, %s75
      %s78 = sphi 0, %s77
      %s92 = sphi 0, %s78
      %s98 = sphi 0, %s100
      %s101 = sphi 0, %s98
      %s102 = sphi 0, %s101
      %s118 = sphi 0, %s102
    $region4: #{tpu_custom_call.1} parent=1 // loop_header_branch
      %23 = sbr.rel (%p21) target = $region8
    $region5: #{tpu_custom_call.1} parent=1 // loop_body
      %s25 = ssub.s32 %s20, 1
      %s26 = ssub.s32 %s20, 2
      %s27 = sadd.s32 %s20, 1
      %s28 = ssub.s32 %s20, %s27
      %p29 = scmp.eq.s32.totalorder %s28, 0
      %s31 = sadd.s32 %s30, 1
      %s32 = scalar_select %p29, %s30, %s31
      %p35 = pneg %p29
      %p36 = scmp.eq.s32.totalorder %s20, 1
      %p37 = por %p35, %p36
      %p38 = scmp.ne.s32.totalorder %s30, %s33
      %p39 = scmp.eq.s32.totalorder %s20, 0
      %p40 = por %p38, %p39
      %p41 = scmp.ne.s32.totalorder %s30, %s33
      %p42 = scmp.eq.s32.totalorder %s25, 1
      %p43 = por %p41, %p42
      %p44 = scmp.ne.s32.totalorder %s33, %s34
      %p45 = scmp.eq.s32.totalorder %s25, 0
      %p46 = por %p44, %p45
      %p47 = scmp.ne.s32.totalorder %s33, %s34
      %p48 = scmp.eq.s32.totalorder %s26, 1
      %p49 = por %p47, %p48
      %p51 = scmp.ne.s32.totalorder %s34, %s50
      %p52 = scmp.eq.s32.totalorder %s26, 0
      %p53 = por %p51, %p52
      %s55 = sadd.s32 %s54, 1
      %p58 = scmp.eq.s32.totalorder %s20, 1
      %p59 = scmp.ne.s32.totalorder %s54, %s56
      %p60 = scmp.eq.s32.totalorder %s20, 0
      %p61 = por %p59, %p60
      %p62 = scmp.ne.s32.totalorder %s54, %s56
      %p63 = scmp.eq.s32.totalorder %s25, 1
      %p64 = por %p62, %p63
      %p65 = scmp.ne.s32.totalorder %s56, %s57
      %p66 = scmp.eq.s32.totalorder %s25, 0
      %p67 = por %p65, %p66
      %p68 = scmp.ne.s32.totalorder %s56, %s57
      %p69 = scmp.eq.s32.totalorder %s26, 1
      %p70 = por %p68, %p69
      %p72 = scmp.ne.s32.totalorder %s57, %s71
      %p73 = scmp.eq.s32.totalorder %s26, 0
      %p74 = por %p72, %p73
      %s76 = sadd.s32 %s75, 1
      %p79 = scmp.eq.s32.totalorder %s20, 1
      %p80 = scmp.ne.s32.totalorder %s75, %s77
      %p81 = scmp.eq.s32.totalorder %s20, 0
      %p82 = por %p80, %p81
      %p83 = scmp.ne.s32.totalorder %s75, %s77
      %p84 = scmp.eq.s32.totalorder %s25, 1
      %p85 = por %p83, %p84
      %p86 = scmp.ne.s32.totalorder %s77, %s78
      %p87 = scmp.eq.s32.totalorder %s25, 0
      %p88 = por %p86, %p87
      %p89 = scmp.ne.s32.totalorder %s77, %s78
      %p90 = scmp.eq.s32.totalorder %s26, 1
      %p91 = por %p89, %p90
      %p93 = scmp.ne.s32.totalorder %s78, %s92
      %p94 = scmp.eq.s32.totalorder %s26, 0
      %p95 = por %p93, %p94
      %s96 = ssub.s32 %s20, %s27
      %p97 = scmp.eq.s32.totalorder %s96, 0
      %s99 = sadd.s32 %s98, 1
      %s100 = scalar_select %p97, %s98, %s99
      %p103 = pneg %p97
      %p104 = scmp.eq.s32.totalorder %s20, 1
      %p105 = por %p103, %p104
      %p106 = scmp.ne.s32.totalorder %s98, %s101
      %p107 = scmp.eq.s32.totalorder %s20, 0
      %p108 = por %p106, %p107
      %p109 = scmp.ne.s32.totalorder %s98, %s101
      %p110 = scmp.eq.s32.totalorder %s25, 1
      %p111 = por %p109, %p110
      %p112 = scmp.ne.s32.totalorder %s101, %s102
      %p113 = scmp.eq.s32.totalorder %s25, 0
      %p114 = por %p112, %p113
      %p115 = scmp.ne.s32.totalorder %s101, %s102
      %p116 = scmp.eq.s32.totalorder %s26, 1
      %p117 = por %p115, %p116
      %p119 = scmp.ne.s32.totalorder %s102, %s118
      %p120 = scmp.eq.s32.totalorder %s26, 0
      %p121 = por %p119, %p120
      %p122 = scmp.le.s32.totalorder 1, %s20
      %p123 = scmp.lt.s32.totalorder %s20, 3
      %p124 = pnand %p122, %p123
      %p125 = pneg %p124
      // Predicated region
      $region9: #{tpu_custom_call.1} parent=5 // pred_check
        _
      $region10: #{tpu_custom_call.1} parent=5 // pred_check_branch
        %127 = sbr.rel (%p124) target = $region12
      $region11: #{tpu_custom_call.1} parent=5 // pred_region
        %s128 = ssub.s32 %s20, 1
        // Predicated region
        $region13: #{tpu_custom_call.1} parent=11 // pred_check
          %p129 = pneg %p67
        $region14: #{tpu_custom_call.1} parent=11 // pred_check_branch
          %131 = sbr.rel (%p129) target = $region16
        $region15: #{tpu_custom_call.1} parent=11 // pred_region
          _
        $region16: #{tpu_custom_call.1} parent=11 // pred_fallthru
          _
        // Predicated region
        $region17: #{tpu_custom_call.1} parent=11 // pred_check
          %p132 = pneg %p88
        $region18: #{tpu_custom_call.1} parent=11 // pred_check_branch
          %134 = sbr.rel (%p132) target = $region20
        $region19: #{tpu_custom_call.1} parent=11 // pred_region
          _
        $region20: #{tpu_custom_call.1} parent=11 // pred_fallthru
          _
      $region12: #{tpu_custom_call.1} parent=5 // pred_fallthru
        _
      %p135 = scmp.lt.s32.totalorder %s20, 2
      // Predicated region
      $region21: #{tpu_custom_call.1} parent=5 // pred_check
        %p136 = pneg %p135
      $region22: #{tpu_custom_call.1} parent=5 // pred_check_branch
        %138 = sbr.rel (%p136) target = $region24
      $region23: #{tpu_custom_call.1} parent=5 // pred_region
        // Predicated region
        $region25: #{tpu_custom_call.1} parent=23 // pred_check
          %p139 = pneg %p40
        $region26: #{tpu_custom_call.1} parent=23 // pred_check_branch
          %141 = sbr.rel (%p139) target = $region28
        $region27: #{tpu_custom_call.1} parent=23 // pred_region
          %p142 = scmp.lt.s32.totalorder %s20, 1
          %s143 = scalar_select %p142, %s20, 1
          %s144 = smul.addr %s143, 10
          %s145 = smul.addr %s144, 8
          %s146 = scalar_lea.vmem %s1, %s145
        $region28: #{tpu_custom_call.1} parent=23 // pred_fallthru
          _
      $region24: #{tpu_custom_call.1} parent=5 // pred_fallthru
        _
      %p147 = scmp.le.s32.totalorder 1, %s20
      %p148 = scmp.lt.s32.totalorder %s20, 3
      %p149 = pnand %p147, %p148
      %p150 = pneg %p149
      // Predicated region
      $region29: #{tpu_custom_call.1} parent=5 // pred_check
        _
      $region30: #{tpu_custom_call.1} parent=5 // pred_check_branch
        %152 = sbr.rel (%p149) target = $region32
      $region31: #{tpu_custom_call.1} parent=5 // pred_region
        %s153 = ssub.s32 %s20, 1
        %p154 = scmp.lt.s32.totalorder %s25, 1
        %s155 = scalar_select %p154, %s25, 1
        %s156 = smul.addr %s155, 10
        %s157 = smul.addr %s156, 8
        %s158 = scalar_lea.vmem %s1, %s157
        %p159 = pneg %p46
        %p160 = pneg %p43
        %p161 = pneg %p67
        %p162 = pneg %p64
        %p163 = pneg %p88
        %p164 = pneg %p85
        %p165 = pneg %p114
        %p166 = pneg %p111
        %s167 = sand.u32 %s101, 1
        %s168 = scalar_lea.sflag [#allocation7], %s167
        %s169 = sand.u32 %s101, 1
        %s170 = smul.addr %s169, 64
        %s171 = scalar_lea.vmem [#allocation6], %s170
        %p172 = scmp.lt.s32.totalorder %s25, 1
        %s173 = scalar_select %p172, %s25, 1
        %s174 = smul.addr %s173, 10
        %s175 = smul.addr %s174, 8
        %s176 = scalar_lea.vmem %s1, %s175
        %v177 = vld [vmem:[%s176] sm:$0xff]
        %v178 = vld [vmem:[%s176 + $0x8] sm:$0xff]
        %v179 = vld [vmem:[%s176 + $0x10] sm:$0xff]
        %v180 = vld [vmem:[%s176 + $0x18] sm:$0xff]
        %v181 = vld [vmem:[%s176 + $0x20] sm:$0xff]
        %v182 = vld [vmem:[%s176 + $0x28] sm:$0xff]
        %v183 = vld [vmem:[%s176 + $0x30] sm:$0xff]
        %v184 = vld [vmem:[%s176 + $0x38] sm:$0xff]
        %v185 = vld [vmem:[%s176 + $0x40] sm:$0x1]
        %v186 = vld [vmem:[%s176 + $0x48] sm:$0x1]
        %v187 = vld [vmem:[%s2] sm:$0xff]
        %v188 = vld [vmem:[%s2 + $0x8] sm:$0xff]
        %v189 = vld [vmem:[%s2 + $0x10] sm:$0xff]
        %v190 = vld [vmem:[%s2 + $0x18] sm:$0xff]
        %v191 = vld [vmem:[%s2 + $0x20] sm:$0xff]
        %vm192 = vcmask 269312
        %v194 = vsel %vm192, %v187, 0
        %v197 = vsel %vm192, %v188, 0
        %v200 = vsel %vm192, %v189, 0
        %v203 = vsel %vm192, %v190, 0
        %v206 = vsel %vm192, %v191, 0
        %vm208 = vcmask 1040384
        %v210 = vsel %vm208, %v185, 0
        %v213 = vsel %vm208, %v186, 0
        %215 = vmatprep.subr.mxu0 %v178
        %216 = vmatpush1.msra.mxu0 %v177
        %217 = vmatprep.subr.mxu0 %v180
        %218 = vmatpush1.msra.mxu0 %v179
        %219 = vmatprep.subr.mxu0 %v182
        %220 = vmatpush1.msra.mxu0 %v181
        %221 = vmatprep.subr.mxu0 %v184
        %222 = vmatpush1.msra.mxu0 %v183
        %223 = vmatprep.subr.mxu0 %v213
        %224 = vmatpush1.msra.mxu0 %v210
        %225 = vmatprep.subr.mxu0 0.0
        %226 = vmatpush1.msra.mxu0 0.0
        %227 = vmatprep.subr.mxu0 0.0
        %228 = vmatpush1.msra.mxu0 0.0
        %229 = vmatprep.subr.mxu0 0.0
        %230 = vmatpush1.msra.mxu0 0.0
        %231 = vmatprep.subr.mxu0 0.0
        %232 = vmatpush1.msra.mxu0 0.0
        %233 = vmatprep.subr.mxu0 0.0
        %234 = vmatpush1.msra.mxu0 0.0
        %235 = vmatprep.subr.mxu0 0.0
        %236 = vmatpush1.msra.mxu0 0.0
        %237 = vmatprep.subr.mxu0 0.0
        %238 = vmatpush1.msra.mxu0 0.0
        %239 = vmatprep.subr.mxu0 0.0
        %240 = vmatpush1.msra.mxu0 0.0
        %241 = vmatprep.subr.mxu0 0.0
        %242 = vmatpush1.msra.mxu0 0.0
        %243 = vmatprep.subr.mxu0 0.0
        %244 = vmatpush1.msra.mxu0 0.0
        %245 = vmatprep.subr.mxu0 0.0
        %246 = vmatpush1.msra.mxu0 0.0
        %247 = vmatprep.subr.mxu0 0.0
        %248 = vmatpush1.msra.mxu0 0.0
        %249 = vmatprep.subr.mxu0 0.0
        %250 = vmatpush1.msra.mxu0 0.0
        %251 = vmatprep.subr.mxu0 0.0
        %252 = vmatpush1.msra.mxu0 0.0
        %253 = vmatprep.subr.mxu0 0.0
        %254 = vmatpush1.msra.mxu0 0.0
        %255 = vmatprep.subr.mxu0 0.0
        %256 = vmatpush1.msra.mxu0 0.0
        %257 = vmatprep.subr.mxu0 0.0
        %258 = vmatpush1.msra.mxu0 0.0
        %259 = vmatprep.subr.mxu0 0.0
        %260 = vmatpush1.msra.mxu0 0.0
        %261 = vmatprep.subr.mxu0 0.0
        %262 = vmatpush1.msra.mxu0 0.0
        %263 = vmatprep.subr.mxu0 0.0
        %264 = vmatpush1.msra.mxu0 0.0
        %265 = vmatprep.subr.mxu0 0.0
        %266 = vmatpush1.msra.mxu0 0.0
        %267 = vmatprep.subr.mxu0 0.0
        %268 = vmatpush1.msra.mxu0 0.0
        %269 = vmatprep.subr.mxu0 0.0
        %270 = vmatpush1.msra.mxu0 0.0
        %271 = vmatprep.subr.mxu0 0.0
        %272 = vmatpush1.msra.mxu0 0.0
        %273 = vmatprep.subr.mxu0 0.0
        %274 = vmatpush1.msra.mxu0 0.0
        %275 = vmatprep.subr.mxu0 0.0
        %276 = vmatpush1.msra.mxu0 0.0
        %277 = vmatprep.subr.mxu0 0.0
        %278 = vmatpush1.msra.mxu0 0.0
        %279 = vmatprep.mubr.f32.mxu0 0.0
        %280 = vmatmul.mubr.f32.gmra.mrb[0].mxu0 %v194
        %v281 = vpop.f32.mrb[0].mxu0
        %v282 = vadd.f32 0.0, %v281
        %v283 = vpop.f32.mrb[0].mxu0
        %v284 = vadd.f32 0.0, %v283
        %285 = vmatprep.mubr.f32.mxu0 0.0
        %286 = vmatmul.mubr.f32.gmra.mrb[0].mxu0 %v197
        %v287 = vpop.f32.mrb[0].mxu0
        %v288 = vadd.f32 0.0, %v287
        %v289 = vpop.f32.mrb[0].mxu0
        %v290 = vadd.f32 0.0, %v289
        %291 = vmatprep.mubr.f32.mxu0 0.0
        %292 = vmatmul.mubr.f32.gmra.mrb[0].mxu0 %v200
        %v293 = vpop.f32.mrb[0].mxu0
        %v294 = vadd.f32 0.0, %v293
        %v295 = vpop.f32.mrb[0].mxu0
        %v296 = vadd.f32 0.0, %v295
        %297 = vmatprep.mubr.f32.mxu0 0.0
        %298 = vmatmul.mubr.f32.gmra.mrb[0].mxu0 %v203
        %v299 = vpop.f32.mrb[0].mxu0
        %v300 = vadd.f32 0.0, %v299
        %v301 = vpop.f32.mrb[0].mxu0
        %v302 = vadd.f32 0.0, %v301
        %303 = vmatprep.mubr.f32.mxu0 0.0
        %304 = vmatmul.mubr.f32.gmra.mrb[0].mxu0 %v206
        %v305 = vpop.f32.mrb[0].mxu0
        %v306 = vadd.f32 0.0, %v305
        %v307 = vpop.f32.mrb[0].mxu0
        %v308 = vadd.f32 0.0, %v307
        %309 = vdwg.mxu0
        %v312 = vrot.slane %v282, 4
        %v313 = vrot.slane %v284, 4
        %316 = vxpose.xlu0.b32.start [1/16] %v312, 128
        %317 = vxpose.xlu0.b32.cont [2/16] 0.0, 128
        %318 = vxpose.xlu0.b32.cont [3/16] 0.0, 128
        %319 = vxpose.xlu0.b32.cont [4/16] 0.0, 128
        %320 = vxpose.xlu0.b32.cont [5/16] 0.0, 128
        %321 = vxpose.xlu0.b32.cont [6/16] 0.0, 128
        %322 = vxpose.xlu0.b32.cont [7/16] 0.0, 128
        %323 = vxpose.xlu0.b32.cont [8/16] 0.0, 128
        %324 = vxpose.xlu0.b32.cont [9/16] 0.0, 128
        %325 = vxpose.xlu0.b32.cont [10/16] 0.0, 128
        %326 = vxpose.xlu0.b32.cont [11/16] 0.0, 128
        %327 = vxpose.xlu0.b32.cont [12/16] 0.0, 128
        %328 = vxpose.xlu0.b32.cont [13/16] 0.0, 128
        %329 = vxpose.xlu0.b32.cont [14/16] 0.0, 128
        %330 = vxpose.xlu0.b32.cont [15/16] 0.0, 128
        %331 = vxpose.xlu0.b32.end [16/16] 0.0, 128
        %v332 = vpop.trf.xlu0
        %v333 = vpop.trf.xlu0
        %v334 = vpop.trf.xlu0
        %v335 = vpop.trf.xlu0
        %v336 = vpop.trf.xlu0
        %v337 = vpop.trf.xlu0
        %v338 = vpop.trf.xlu0
        %v339 = vpop.trf.xlu0
        %v340 = vpop.trf.xlu0
        %v341 = vpop.trf.xlu0
        %v342 = vpop.trf.xlu0
        %v343 = vpop.trf.xlu0
        %v344 = vpop.trf.xlu0
        %v345 = vpop.trf.xlu0
        %v346 = vpop.trf.xlu0
        %v347 = vpop.trf.xlu0
        %348 = vxpose.xlu0.b32.start [1/16] %v313, 128
        %349 = vxpose.xlu0.b32.cont [2/16] 0.0, 128
        %350 = vxpose.xlu0.b32.cont [3/16] 0.0, 128
        %351 = vxpose.xlu0.b32.cont [4/16] 0.0, 128
        %352 = vxpose.xlu0.b32.cont [5/16] 0.0, 128
        %353 = vxpose.xlu0.b32.cont [6/16] 0.0, 128
        %354 = vxpose.xlu0.b32.cont [7/16] 0.0, 128
        %355 = vxpose.xlu0.b32.cont [8/16] 0.0, 128
        %356 = vxpose.xlu0.b32.cont [9/16] 0.0, 128
        %357 = vxpose.xlu0.b32.cont [10/16] 0.0, 128
        %358 = vxpose.xlu0.b32.cont [11/16] 0.0, 128
        %359 = vxpose.xlu0.b32.cont [12/16] 0.0, 128
        %360 = vxpose.xlu0.b32.cont [13/16] 0.0, 128
        %361 = vxpose.xlu0.b32.cont [14/16] 0.0, 128
        %362 = vxpose.xlu0.b32.cont [15/16] 0.0, 128
        %363 = vxpose.xlu0.b32.end [16/16] 0.0, 128
        %v364 = vpop.trf.xlu0
        %v365 = vpop.trf.xlu0
        %v366 = vpop.trf.xlu0
        %v367 = vpop.trf.xlu0
        %v368 = vpop.trf.xlu0
        %v369 = vpop.trf.xlu0
        %v370 = vpop.trf.xlu0
        %v371 = vpop.trf.xlu0
        %v372 = vpop.trf.xlu0
        %v373 = vpop.trf.xlu0
        %v374 = vpop.trf.xlu0
        %v375 = vpop.trf.xlu0
        %v376 = vpop.trf.xlu0
        %v377 = vpop.trf.xlu0
        %v378 = vpop.trf.xlu0
        %v379 = vpop.trf.xlu0
        %vm380 = vcmask 31744
        %v382 = vsel %vm380, %v332, 0
        %v385 = vsel %vm380, %v333, 0
        %v388 = vsel %vm380, %v334, 0
        %v391 = vsel %vm380, %v335, 0
        %v394 = vsel %vm380, %v336, 0
        %v397 = vsel %vm380, %v337, 0
        %v400 = vsel %vm380, %v338, 0
        %v403 = vsel %vm380, %v339, 0
        %v406 = vsel %vm380, %v340, 0
        %v409 = vsel %vm380, %v341, 0
        %v412 = vsel %vm380, %v342, 0
        %v415 = vsel %vm380, %v343, 0
        %v418 = vsel %vm380, %v344, 0
        %v421 = vsel %vm380, %v345, 0
        %v424 = vsel %vm380, %v346, 0
        %v427 = vsel %vm380, %v347, 0
        %v430 = vsel %vm380, %v364, 0
        %v433 = vsel %vm380, %v365, 0
        %v436 = vsel %vm380, %v366, 0
        %v439 = vsel %vm380, %v367, 0
        %v442 = vsel %vm380, %v368, 0
        %v445 = vsel %vm380, %v369, 0
        %v448 = vsel %vm380, %v370, 0
        %v451 = vsel %vm380, %v371, 0
        %v454 = vsel %vm380, %v372, 0
        %v457 = vsel %vm380, %v373, 0
        %v460 = vsel %vm380, %v374, 0
        %v463 = vsel %vm380, %v375, 0
        %v466 = vsel %vm380, %v376, 0
        %v469 = vsel %vm380, %v377, 0
        %v472 = vsel %vm380, %v378, 0
        %v475 = vsel %vm380, %v379, 0
        %vm477 = vcmask 1043456
        %v478 = vsel %vm477, %v282, 0
        %v480 = vsel %vm477, %v284, 0
        %482 = vmatprep.subr.mxu0 %v480
        %483 = vmatpush1.msra.mxu0 %v478
        %484 = vmatprep.subr.mxu0 0.0
        %485 = vmatpush1.msra.mxu0 0.0
        %486 = vmatprep.subr.mxu0 0.0
        %487 = vmatpush1.msra.mxu0 0.0
        %488 = vmatprep.subr.mxu0 0.0
        %489 = vmatpush1.msra.mxu0 0.0
        %490 = vmatprep.subr.mxu0 0.0
        %491 = vmatpush1.msra.mxu0 0.0
        %492 = vmatprep.subr.mxu0 0.0
        %493 = vmatpush1.msra.mxu0 0.0
        %494 = vmatprep.subr.mxu0 0.0
        %495 = vmatpush1.msra.mxu0 0.0
        %496 = vmatprep.subr.mxu0 0.0
        %497 = vmatpush1.msra.mxu0 0.0
        %498 = vmatprep.subr.mxu0 0.0
        %499 = vmatpush1.msra.mxu0 0.0
        %500 = vmatprep.subr.mxu0 0.0
        %501 = vmatpush1.msra.mxu0 0.0
        %502 = vmatprep.subr.mxu0 0.0
        %503 = vmatpush1.msra.mxu0 0.0
        %504 = vmatprep.subr.mxu0 0.0
        %505 = vmatpush1.msra.mxu0 0.0
        %506 = vmatprep.subr.mxu0 0.0
        %507 = vmatpush1.msra.mxu0 0.0
        %508 = vmatprep.subr.mxu0 0.0
        %509 = vmatpush1.msra.mxu0 0.0
        %510 = vmatprep.subr.mxu0 0.0
        %511 = vmatpush1.msra.mxu0 0.0
        %512 = vmatprep.subr.mxu0 0.0
        %513 = vmatpush1.msra.mxu0 0.0
        %514 = vmatprep.subr.mxu0 0.0
        %515 = vmatpush1.msra.mxu0 0.0
        %516 = vmatprep.subr.mxu0 0.0
        %517 = vmatpush1.msra.mxu0 0.0
        %518 = vmatprep.subr.mxu0 0.0
        %519 = vmatpush1.msra.mxu0 0.0
        %520 = vmatprep.subr.mxu0 0.0
        %521 = vmatpush1.msra.mxu0 0.0
        %522 = vmatprep.subr.mxu0 0.0
        %523 = vmatpush1.msra.mxu0 0.0
        %524 = vmatprep.subr.mxu0 0.0
        %525 = vmatpush1.msra.mxu0 0.0
        %526 = vmatprep.subr.mxu0 0.0
        %527 = vmatpush1.msra.mxu0 0.0
        %528 = vmatprep.subr.mxu0 0.0
        %529 = vmatpush1.msra.mxu0 0.0
        %530 = vmatprep.subr.mxu0 0.0
        %531 = vmatpush1.msra.mxu0 0.0
        %532 = vmatprep.subr.mxu0 0.0
        %533 = vmatpush1.msra.mxu0 0.0
        %534 = vmatprep.subr.mxu0 0.0
        %535 = vmatpush1.msra.mxu0 0.0
        %536 = vmatprep.subr.mxu0 0.0
        %537 = vmatpush1.msra.mxu0 0.0
        %538 = vmatprep.subr.mxu0 0.0
        %539 = vmatpush1.msra.mxu0 0.0
        %540 = vmatprep.subr.mxu0 0.0
        %541 = vmatpush1.msra.mxu0 0.0
        %542 = vmatprep.subr.mxu0 0.0
        %543 = vmatpush1.msra.mxu0 0.0
        %544 = vmatprep.subr.mxu0 0.0
        %545 = vmatpush1.msra.mxu0 0.0
        %546 = vmatprep.mubr.f32.mxu0 0.0
        %547 = vmatmul.mubr.f32.gmra.mrb[0].mxu0 %v382
        %v548 = vpop.f32.mrb[0].mxu0
        %v549 = vadd.f32 0.0, %v548
        %v550 = vpop.f32.mrb[0].mxu0
        %v551 = vadd.f32 0.0, %v550
        %552 = vmatprep.mubr.f32.mxu0 0.0
        %553 = vmatmul.mubr.f32.gmra.mrb[0].mxu0 %v385
        %v554 = vpop.f32.mrb[0].mxu0
        %v555 = vadd.f32 0.0, %v554
        %v556 = vpop.f32.mrb[0].mxu0
        %v557 = vadd.f32 0.0, %v556
        %558 = vmatprep.mubr.f32.mxu0 0.0
        %559 = vmatmul.mubr.f32.gmra.mrb[0].mxu0 %v388
        %v560 = vpop.f32.mrb[0].mxu0
        %v561 = vadd.f32 0.0, %v560
        %v562 = vpop.f32.mrb[0].mxu0
        %v563 = vadd.f32 0.0, %v562
        %564 = vmatprep.mubr.f32.mxu0 0.0
        %565 = vmatmul.mubr.f32.gmra.mrb[0].mxu0 %v391
        %v566 = vpop.f32.mrb[0].mxu0
        %v567 = vadd.f32 0.0, %v566
        %v568 = vpop.f32.mrb[0].mxu0
        %v569 = vadd.f32 0.0, %v568
        %570 = vmatprep.mubr.f32.mxu0 0.0
        %571 = vmatmul.mubr.f32.gmra.mrb[0].mxu0 %v394
        %v572 = vpop.f32.mrb[0].mxu0
        %v573 = vadd.f32 0.0, %v572
        %v574 = vpop.f32.mrb[0].mxu0
        %v575 = vadd.f32 0.0, %v574
        %576 = vmatprep.mubr.f32.mxu0 0.0
        %577 = vmatmul.mubr.f32.gmra.mrb[0].mxu0 %v397
        %v578 = vpop.f32.mrb[0].mxu0
        %v579 = vadd.f32 0.0, %v578
        %v580 = vpop.f32.mrb[0].mxu0
        %v581 = vadd.f32 0.0, %v580
        %582 = vmatprep.mubr.f32.mxu0 0.0
        %583 = vmatmul.mubr.f32.gmra.mrb[0].mxu0 %v400
        %v584 = vpop.f32.mrb[0].mxu0
        %v585 = vadd.f32 0.0, %v584
        %v586 = vpop.f32.mrb[0].mxu0
        %v587 = vadd.f32 0.0, %v586
        %588 = vmatprep.mubr.f32.mxu0 0.0
        %589 = vmatmul.mubr.f32.gmra.mrb[0].mxu0 %v403
        %v590 = vpop.f32.mrb[0].mxu0
        %v591 = vadd.f32 0.0, %v590
        %v592 = vpop.f32.mrb[0].mxu0
        %v593 = vadd.f32 0.0, %v592
        %594 = vmatprep.mubr.f32.mxu0 0.0
        %595 = vmatmul.mubr.f32.gmra.mrb[0].mxu0 %v406
        %v596 = vpop.f32.mrb[0].mxu0
        %v597 = vadd.f32 0.0, %v596
        %v598 = vpop.f32.mrb[0].mxu0
        %v599 = vadd.f32 0.0, %v598
        %600 = vmatprep.mubr.f32.mxu0 0.0
        %601 = vmatmul.mubr.f32.gmra.mrb[0].mxu0 %v409
        %v602 = vpop.f32.mrb[0].mxu0
        %v603 = vadd.f32 0.0, %v602
        %v604 = vpop.f32.mrb[0].mxu0
        %v605 = vadd.f32 0.0, %v604
        %606 = vmatprep.mubr.f32.mxu0 0.0
        %607 = vmatmul.mubr.f32.gmra.mrb[0].mxu0 %v412
        %v608 = vpop.f32.mrb[0].mxu0
        %v609 = vadd.f32 0.0, %v608
        %v610 = vpop.f32.mrb[0].mxu0
        %v611 = vadd.f32 0.0, %v610
        %612 = vmatprep.mubr.f32.mxu0 0.0
        %613 = vmatmul.mubr.f32.gmra.mrb[0].mxu0 %v415
        %v614 = vpop.f32.mrb[0].mxu0
        %v615 = vadd.f32 0.0, %v614
        %v616 = vpop.f32.mrb[0].mxu0
        %v617 = vadd.f32 0.0, %v616
        %618 = vmatprep.mubr.f32.mxu0 0.0
        %619 = vmatmul.mubr.f32.gmra.mrb[0].mxu0 %v418
        %v620 = vpop.f32.mrb[0].mxu0
        %v621 = vadd.f32 0.0, %v620
        %v622 = vpop.f32.mrb[0].mxu0
        %v623 = vadd.f32 0.0, %v622
        %624 = vmatprep.mubr.f32.mxu0 0.0
        %625 = vmatmul.mubr.f32.gmra.mrb[0].mxu0 %v421
        %v626 = vpop.f32.mrb[0].mxu0
        %v627 = vadd.f32 0.0, %v626
        %v628 = vpop.f32.mrb[0].mxu0
        %v629 = vadd.f32 0.0, %v628
        %630 = vmatprep.mubr.f32.mxu0 0.0
        %631 = vmatmul.mubr.f32.gmra.mrb[0].mxu0 %v424
        %v632 = vpop.f32.mrb[0].mxu0
        %v633 = vadd.f32 0.0, %v632
        %v634 = vpop.f32.mrb[0].mxu0
        %v635 = vadd.f32 0.0, %v634
        %636 = vmatprep.mubr.f32.mxu0 0.0
        %637 = vmatmul.mubr.f32.gmra.mrb[0].mxu0 %v427
        %v638 = vpop.f32.mrb[0].mxu0
        %v639 = vadd.f32 0.0, %v638
        %v640 = vpop.f32.mrb[0].mxu0
        %v641 = vadd.f32 0.0, %v640
        %642 = vmatprep.mubr.f32.mxu0 0.0
        %643 = vmatmul.mubr.f32.gmra.mrb[0].mxu0 %v430
        %v644 = vpop.f32.mrb[0].mxu0
        %v645 = vadd.f32 0.0, %v644
        %v646 = vpop.f32.mrb[0].mxu0
        %v647 = vadd.f32 0.0, %v646
        %648 = vmatprep.mubr.f32.mxu0 0.0
        %649 = vmatmul.mubr.f32.gmra.mrb[0].mxu0 %v433
        %v650 = vpop.f32.mrb[0].mxu0
        %v651 = vadd.f32 0.0, %v650
        %v652 = vpop.f32.mrb[0].mxu0
        %v653 = vadd.f32 0.0, %v652
        %654 = vmatprep.mubr.f32.mxu0 0.0
        %655 = vmatmul.mubr.f32.gmra.mrb[0].mxu0 %v436
        %v656 = vpop.f32.mrb[0].mxu0
        %v657 = vadd.f32 0.0, %v656
        %v658 = vpop.f32.mrb[0].mxu0
        %v659 = vadd.f32 0.0, %v658
        %660 = vmatprep.mubr.f32.mxu0 0.0
        %661 = vmatmul.mubr.f32.gmra.mrb[0].mxu0 %v439
        %v662 = vpop.f32.mrb[0].mxu0
        %v663 = vadd.f32 0.0, %v662
        %v664 = vpop.f32.mrb[0].mxu0
        %v665 = vadd.f32 0.0, %v664
        %666 = vmatprep.mubr.f32.mxu0 0.0
        %667 = vmatmul.mubr.f32.gmra.mrb[0].mxu0 %v442
        %v668 = vpop.f32.mrb[0].mxu0
        %v669 = vadd.f32 0.0, %v668
        %v670 = vpop.f32.mrb[0].mxu0
        %v671 = vadd.f32 0.0, %v670
        %672 = vmatprep.mubr.f32.mxu0 0.0
        %673 = vmatmul.mubr.f32.gmra.mrb[0].mxu0 %v445
        %v674 = vpop.f32.mrb[0].mxu0
        %v675 = vadd.f32 0.0, %v674
        %v676 = vpop.f32.mrb[0].mxu0
        %v677 = vadd.f32 0.0, %v676
        %678 = vmatprep.mubr.f32.mxu0 0.0
        %679 = vmatmul.mubr.f32.gmra.mrb[0].mxu0 %v448
        %v680 = vpop.f32.mrb[0].mxu0
        %v681 = vadd.f32 0.0, %v680
        %v682 = vpop.f32.mrb[0].mxu0
        %v683 = vadd.f32 0.0, %v682
        %684 = vmatprep.mubr.f32.mxu0 0.0
        %685 = vmatmul.mubr.f32.gmra.mrb[0].mxu0 %v451
        %v686 = vpop.f32.mrb[0].mxu0
        %v687 = vadd.f32 0.0, %v686
        %v688 = vpop.f32.mrb[0].mxu0
        %v689 = vadd.f32 0.0, %v688
        %690 = vmatprep.mubr.f32.mxu0 0.0
        %691 = vmatmul.mubr.f32.gmra.mrb[0].mxu0 %v454
        %v692 = vpop.f32.mrb[0].mxu0
        %v693 = vadd.f32 0.0, %v692
        %v694 = vpop.f32.mrb[0].mxu0
        %v695 = vadd.f32 0.0, %v694
        %696 = vmatprep.mubr.f32.mxu0 0.0
        %697 = vmatmul.mubr.f32.gmra.mrb[0].mxu0 %v457
        %v698 = vpop.f32.mrb[0].mxu0
        %v699 = vadd.f32 0.0, %v698
        %v700 = vpop.f32.mrb[0].mxu0
        %v701 = vadd.f32 0.0, %v700
        %702 = vmatprep.mubr.f32.mxu0 0.0
        %703 = vmatmul.mubr.f32.gmra.mrb[0].mxu0 %v460
        %v704 = vpop.f32.mrb[0].mxu0
        %v705 = vadd.f32 0.0, %v704
        %v706 = vpop.f32.mrb[0].mxu0
        %v707 = vadd.f32 0.0, %v706
        %708 = vmatprep.mubr.f32.mxu0 0.0
        %709 = vmatmul.mubr.f32.gmra.mrb[0].mxu0 %v463
        %v710 = vpop.f32.mrb[0].mxu0
        %v711 = vadd.f32 0.0, %v710
        %v712 = vpop.f32.mrb[0].mxu0
        %v713 = vadd.f32 0.0, %v712
        %714 = vmatprep.mubr.f32.mxu0 0.0
        %715 = vmatmul.mubr.f32.gmra.mrb[0].mxu0 %v466
        %v716 = vpop.f32.mrb[0].mxu0
        %v717 = vadd.f32 0.0, %v716
        %v718 = vpop.f32.mrb[0].mxu0
        %v719 = vadd.f32 0.0, %v718
        %720 = vmatprep.mubr.f32.mxu0 0.0
        %721 = vmatmul.mubr.f32.gmra.mrb[0].mxu0 %v469
        %v722 = vpop.f32.mrb[0].mxu0
        %v723 = vadd.f32 0.0, %v722
        %v724 = vpop.f32.mrb[0].mxu0
        %v725 = vadd.f32 0.0, %v724
        %726 = vmatprep.mubr.f32.mxu0 0.0
        %727 = vmatmul.mubr.f32.gmra.mrb[0].mxu0 %v472
        %v728 = vpop.f32.mrb[0].mxu0
        %v729 = vadd.f32 0.0, %v728
        %v730 = vpop.f32.mrb[0].mxu0
        %v731 = vadd.f32 0.0, %v730
        %732 = vmatprep.mubr.f32.mxu0 0.0
        %733 = vmatmul.mubr.f32.gmra.mrb[0].mxu0 %v475
        %v734 = vpop.f32.mrb[0].mxu0
        %v735 = vadd.f32 0.0, %v734
        %v736 = vpop.f32.mrb[0].mxu0
        %v737 = vadd.f32 0.0, %v736
        %738 = vdwg.mxu0
        %v739 = vmax.f32 %v549, %v561
        %v740 = vmax.f32 %v555, %v567
        %v741 = vmax.f32 %v739, %v573
        %v742 = vmax.f32 %v740, %v579
        %v743 = vmax.f32 %v741, %v585
        %v744 = vmax.f32 %v742, %v591
        %v745 = vmax.f32 %v743, %v597
        %v746 = vmax.f32 %v744, %v603
        %v747 = vmax.f32 %v745, %v609
        %v748 = vmax.f32 %v746, %v615
        %v749 = vmax.f32 %v747, %v621
        %v750 = vmax.f32 %v748, %v627
        %v751 = vmax.f32 %v749, %v633
        %v752 = vmax.f32 %v750, %v639
        %v753 = vmax.f32 %v751, %v645
        %v754 = vmax.f32 %v752, %v651
        %v755 = vmax.f32 %v753, %v657
        %v756 = vmax.f32 %v754, %v663
        %v757 = vmax.f32 %v755, %v669
        %v758 = vmax.f32 %v756, %v675
        %v759 = vmax.f32 %v757, %v681
        %v760 = vmax.f32 %v758, %v687
        %v761 = vmax.f32 %v759, %v693
        %v762 = vmax.f32 %v760, %v699
        %v763 = vmax.f32 %v761, %v705
        %v764 = vmax.f32 %v762, %v711
        %v765 = vmax.f32 %v763, %v717
        %v766 = vmax.f32 %v764, %v723
        %v767 = vmax.f32 %v765, %v729
        %v768 = vmax.f32 %v766, %v735
        %v769 = vmax.f32 %v767, %v768
        %v770 = vrot.slane %v769, 4
        %v771 = vmax.f32 %v769, %v770
        %v772 = vrot.slane %v771, 2
        %v773 = vmax.f32 %v771, %v772
        %v774 = vrot.slane %v773, 1
        %v775 = vmax.f32 %v773, %v774
        %v776 = vmax.f32 %v551, %v563
        %v777 = vmax.f32 %v557, %v569
        %v778 = vmax.f32 %v776, %v575
        %v779 = vmax.f32 %v777, %v581
        %v780 = vmax.f32 %v778, %v587
        %v781 = vmax.f32 %v779, %v593
        %v782 = vmax.f32 %v780, %v599
        %v783 = vmax.f32 %v781, %v605
        %v784 = vmax.f32 %v782, %v611
        %v785 = vmax.f32 %v783, %v617
        %v786 = vmax.f32 %v784, %v623
        %v787 = vmax.f32 %v785, %v629
        %v788 = vmax.f32 %v786, %v635
        %v789 = vmax.f32 %v787, %v641
        %v790 = vmax.f32 %v788, %v647
        %v791 = vmax.f32 %v789, %v653
        %v792 = vmax.f32 %v790, %v659
        %v793 = vmax.f32 %v791, %v665
        %v794 = vmax.f32 %v792, %v671
        %v795 = vmax.f32 %v793, %v677
        %v796 = vmax.f32 %v794, %v683
        %v797 = vmax.f32 %v795, %v689
        %v798 = vmax.f32 %v796, %v695
        %v799 = vmax.f32 %v797, %v701
        %v800 = vmax.f32 %v798, %v707
        %v801 = vmax.f32 %v799, %v713
        %v802 = vmax.f32 %v800, %v719
        %v803 = vmax.f32 %v801, %v725
        %v804 = vmax.f32 %v802, %v731
        %v805 = vmax.f32 %v803, %v737
        %v806 = vmax.f32 %v804, %v805
        %v807 = vrot.slane %v806, 4
        %v808 = vmax.f32 %v806, %v807
        %v809 = vrot.slane %v808, 2
        %v810 = vmax.f32 %v808, %v809
        %v811 = vrot.slane %v810, 1
        %v812 = vmax.f32 %v810, %v811
        %v813 = vsub.f32 %v549, %v775
        %v814 = vsub.f32 %v551, %v812
        %v815 = vsub.f32 %v555, %v775
        %v816 = vsub.f32 %v557, %v812
        %v817 = vsub.f32 %v561, %v775
        %v818 = vsub.f32 %v563, %v812
        %v819 = vsub.f32 %v567, %v775
        %v820 = vsub.f32 %v569, %v812
        %v821 = vsub.f32 %v573, %v775
        %v822 = vsub.f32 %v575, %v812
        %v823 = vsub.f32 %v579, %v775
        %v824 = vsub.f32 %v581, %v812
        %v825 = vsub.f32 %v585, %v775
        %v826 = vsub.f32 %v587, %v812
        %v827 = vsub.f32 %v591, %v775
        %v828 = vsub.f32 %v593, %v812
        %v829 = vsub.f32 %v597, %v775
        %v830 = vsub.f32 %v599, %v812
        %v831 = vsub.f32 %v603, %v775
        %v832 = vsub.f32 %v605, %v812
        %v833 = vsub.f32 %v609, %v775
        %v834 = vsub.f32 %v611, %v812
        %v835 = vsub.f32 %v615, %v775
        %v836 = vsub.f32 %v617, %v812
        %v837 = vsub.f32 %v621, %v775
        %v838 = vsub.f32 %v623, %v812
        %v839 = vsub.f32 %v627, %v775
        %v840 = vsub.f32 %v629, %v812
        %v841 = vsub.f32 %v633, %v775
        %v842 = vsub.f32 %v635, %v812
        %v843 = vsub.f32 %v639, %v775
        %v844 = vsub.f32 %v641, %v812
        %v845 = vsub.f32 %v645, %v775
        %v846 = vsub.f32 %v647, %v812
        %v847 = vsub.f32 %v651, %v775
        %v848 = vsub.f32 %v653, %v812
        %v849 = vsub.f32 %v657, %v775
        %v850 = vsub.f32 %v659, %v812
        %v851 = vsub.f32 %v663, %v775
        %v852 = vsub.f32 %v665, %v812
        %v853 = vsub.f32 %v669, %v775
        %v854 = vsub.f32 %v671, %v812
        %v855 = vsub.f32 %v675, %v775
        %v856 = vsub.f32 %v677, %v812
        %v857 = vsub.f32 %v681, %v775
        %v858 = vsub.f32 %v683, %v812
        %v859 = vsub.f32 %v687, %v775
        %v860 = vsub.f32 %v689, %v812
        %v861 = vsub.f32 %v693, %v775
        %v862 = vsub.f32 %v695, %v812
        %v863 = vsub.f32 %v699, %v775
        %v864 = vsub.f32 %v701, %v812
        %v865 = vsub.f32 %v705, %v775
        %v866 = vsub.f32 %v707, %v812
        %v867 = vsub.f32 %v711, %v775
        %v868 = vsub.f32 %v713, %v812
        %v869 = vsub.f32 %v717, %v775
        %v870 = vsub.f32 %v719, %v812
        %v871 = vsub.f32 %v723, %v775
        %v872 = vsub.f32 %v725, %v812
        %v873 = vsub.f32 %v729, %v775
        %v874 = vsub.f32 %v731, %v812
        %v875 = vsub.f32 %v735, %v775
        %v876 = vsub.f32 %v737, %v812
        %v877 = vmul.f32 %v813, 1.442695
        %v878 = vpow.pop %v877
        %v879 = vmul.f32 %v814, 1.442695
        %v880 = vpow.pop %v879
        %v881 = vmul.f32 %v815, 1.442695
        %v882 = vpow.pop %v881
        %v883 = vmul.f32 %v816, 1.442695
        %v884 = vpow.pop %v883
        %v885 = vmul.f32 %v817, 1.442695
        %v886 = vpow.pop %v885
        %v887 = vmul.f32 %v818, 1.442695
        %v888 = vpow.pop %v887
        %v889 = vmul.f32 %v819, 1.442695
        %v890 = vpow.pop %v889
        %v891 = vmul.f32 %v820, 1.442695
        %v892 = vpow.pop %v891
        %v893 = vmul.f32 %v821, 1.442695
        %v894 = vpow.pop %v893
        %v895 = vmul.f32 %v822, 1.442695
        %v896 = vpow.pop %v895
        %v897 = vmul.f32 %v823, 1.442695
        %v898 = vpow.pop %v897
        %v899 = vmul.f32 %v824, 1.442695
        %v900 = vpow.pop %v899
        %v901 = vmul.f32 %v825, 1.442695
        %v902 = vpow.pop %v901
        %v903 = vmul.f32 %v826, 1.442695
        %v904 = vpow.pop %v903
        %v905 = vmul.f32 %v827, 1.442695
        %v906 = vpow.pop %v905
        %v907 = vmul.f32 %v828, 1.442695
        %v908 = vpow.pop %v907
        %v909 = vmul.f32 %v829, 1.442695
        %v910 = vpow.pop %v909
        %v911 = vmul.f32 %v830, 1.442695
        %v912 = vpow.pop %v911
        %v913 = vmul.f32 %v831, 1.442695
        %v914 = vpow.pop %v913
        %v915 = vmul.f32 %v832, 1.442695
        %v916 = vpow.pop %v915
        %v917 = vmul.f32 %v833, 1.442695
        %v918 = vpow.pop %v917
        %v919 = vmul.f32 %v834, 1.442695
        %v920 = vpow.pop %v919
        %v921 = vmul.f32 %v835, 1.442695
        %v922 = vpow.pop %v921
        %v923 = vmul.f32 %v836, 1.442695
        %v924 = vpow.pop %v923
        %v925 = vmul.f32 %v837, 1.442695
        %v926 = vpow.pop %v925
        %v927 = vmul.f32 %v838, 1.442695
        %v928 = vpow.pop %v927
        %v929 = vmul.f32 %v839, 1.442695
        %v930 = vpow.pop %v929
        %v931 = vmul.f32 %v840, 1.442695
        %v932 = vpow.pop %v931
        %v933 = vmul.f32 %v841, 1.442695
        %v934 = vpow.pop %v933
        %v935 = vmul.f32 %v842, 1.442695
        %v936 = vpow.pop %v935
        %v937 = vmul.f32 %v843, 1.442695
        %v938 = vpow.pop %v937
        %v939 = vmul.f32 %v844, 1.442695
        %v940 = vpow.pop %v939
        %v941 = vmul.f32 %v845, 1.442695
        %v942 = vpow.pop %v941
        %v943 = vmul.f32 %v846, 1.442695
        %v944 = vpow.pop %v943
        %v945 = vmul.f32 %v847, 1.442695
        %v946 = vpow.pop %v945
        %v947 = vmul.f32 %v848, 1.442695
        %v948 = vpow.pop %v947
        %v949 = vmul.f32 %v849, 1.442695
        %v950 = vpow.pop %v949
        %v951 = vmul.f32 %v850, 1.442695
        %v952 = vpow.pop %v951
        %v953 = vmul.f32 %v851, 1.442695
        %v954 = vpow.pop %v953
        %v955 = vmul.f32 %v852, 1.442695
        %v956 = vpow.pop %v955
        %v957 = vmul.f32 %v853, 1.442695
        %v958 = vpow.pop %v957
        %v959 = vmul.f32 %v854, 1.442695
        %v960 = vpow.pop %v959
        %v961 = vmul.f32 %v855, 1.442695
        %v962 = vpow.pop %v961
        %v963 = vmul.f32 %v856, 1.442695
        %v964 = vpow.pop %v963
        %v965 = vmul.f32 %v857, 1.442695
        %v966 = vpow.pop %v965
        %v967 = vmul.f32 %v858, 1.442695
        %v968 = vpow.pop %v967
        %v969 = vmul.f32 %v859, 1.442695
        %v970 = vpow.pop %v969
        %v971 = vmul.f32 %v860, 1.442695
        %v972 = vpow.pop %v971
        %v973 = vmul.f32 %v861, 1.442695
        %v974 = vpow.pop %v973
        %v975 = vmul.f32 %v862, 1.442695
        %v976 = vpow.pop %v975
        %v977 = vmul.f32 %v863, 1.442695
        %v978 = vpow.pop %v977
        %v979 = vmul.f32 %v864, 1.442695
        %v980 = vpow.pop %v979
        %v981 = vmul.f32 %v865, 1.442695
        %v982 = vpow.pop %v981
        %v983 = vmul.f32 %v866, 1.442695
        %v984 = vpow.pop %v983
        %v985 = vmul.f32 %v867, 1.442695
        %v986 = vpow.pop %v985
        %v987 = vmul.f32 %v868, 1.442695
        %v988 = vpow.pop %v987
        %v989 = vmul.f32 %v869, 1.442695
        %v990 = vpow.pop %v989
        %v991 = vmul.f32 %v870, 1.442695
        %v992 = vpow.pop %v991
        %v993 = vmul.f32 %v871, 1.442695
        %v994 = vpow.pop %v993
        %v995 = vmul.f32 %v872, 1.442695
        %v996 = vpow.pop %v995
        %v997 = vmul.f32 %v873, 1.442695
        %v998 = vpow.pop %v997
        %v999 = vmul.f32 %v874, 1.442695
        %v1000 = vpow.pop %v999
        %v1001 = vmul.f32 %v875, 1.442695
        %v1002 = vpow.pop %v1001
        %v1003 = vmul.f32 %v876, 1.442695
        %v1004 = vpow.pop %v1003
        %v1005 = vadd.f32 %v878, %v882
        %v1006 = vadd.f32 %v1005, %v886
        %v1007 = vadd.f32 %v1006, %v890
        %v1008 = vadd.f32 %v1007, %v894
        %v1009 = vadd.f32 %v1008, %v898
        %v1010 = vadd.f32 %v1009, %v902
        %v1011 = vadd.f32 %v1010, %v906
        %v1012 = vadd.f32 %v1011, %v910
        %v1013 = vadd.f32 %v1012, %v914
        %v1014 = vadd.f32 %v1013, %v918
        %v1015 = vadd.f32 %v1014, %v922
        %v1016 = vadd.f32 %v1015, %v926
        %v1017 = vadd.f32 %v1016, %v930
        %v1018 = vadd.f32 %v1017, %v934
        %v1019 = vadd.f32 %v1018, %v938
        %v1020 = vadd.f32 %v1019, %v942
        %v1021 = vadd.f32 %v1020, %v946
        %v1022 = vadd.f32 %v1021, %v950
        %v1023 = vadd.f32 %v1022, %v954
        %v1024 = vadd.f32 %v1023, %v958
        %v1025 = vadd.f32 %v1024, %v962
        %v1026 = vadd.f32 %v1025, %v966
        %v1027 = vadd.f32 %v1026, %v970
        %v1028 = vadd.f32 %v1027, %v974
        %v1029 = vadd.f32 %v1028, %v978
        %v1030 = vadd.f32 %v1029, %v982
        %v1031 = vadd.f32 %v1030, %v986
        %v1032 = vadd.f32 %v1031, %v990
        %v1033 = vadd.f32 %v1032, %v994
        %v1034 = vadd.f32 %v1033, %v998
        %v1035 = vadd.f32 %v1034, %v1002
        %v1036 = vrot.slane %v1035, 4
        %v1037 = vadd.f32 %v1035, %v1036
        %v1038 = vrot.slane %v1037, 2
        %v1039 = vadd.f32 %v1037, %v1038
        %v1040 = vrot.slane %v1039, 1
        %v1041 = vadd.f32 %v1039, %v1040
        %v1042 = vadd.f32 %v880, %v884
        %v1043 = vadd.f32 %v1042, %v888
        %v1044 = vadd.f32 %v1043, %v892
        %v1045 = vadd.f32 %v1044, %v896
        %v1046 = vadd.f32 %v1045, %v900
        %v1047 = vadd.f32 %v1046, %v904
        %v1048 = vadd.f32 %v1047, %v908
        %v1049 = vadd.f32 %v1048, %v912
        %v1050 = vadd.f32 %v1049, %v916
        %v1051 = vadd.f32 %v1050, %v920
        %v1052 = vadd.f32 %v1051, %v924
        %v1053 = vadd.f32 %v1052, %v928
        %v1054 = vadd.f32 %v1053, %v932
        %v1055 = vadd.f32 %v1054, %v936
        %v1056 = vadd.f32 %v1055, %v940
        %v1057 = vadd.f32 %v1056, %v944
        %v1058 = vadd.f32 %v1057, %v948
        %v1059 = vadd.f32 %v1058, %v952
        %v1060 = vadd.f32 %v1059, %v956
        %v1061 = vadd.f32 %v1060, %v960
        %v1062 = vadd.f32 %v1061, %v964
        %v1063 = vadd.f32 %v1062, %v968
        %v1064 = vadd.f32 %v1063, %v972
        %v1065 = vadd.f32 %v1064, %v976
        %v1066 = vadd.f32 %v1065, %v980
        %v1067 = vadd.f32 %v1066, %v984
        %v1068 = vadd.f32 %v1067, %v988
        %v1069 = vadd.f32 %v1068, %v992
        %v1070 = vadd.f32 %v1069, %v996
        %v1071 = vadd.f32 %v1070, %v1000
        %v1072 = vadd.f32 %v1071, %v1004
        %v1073 = vrot.slane %v1072, 4
        %v1074 = vadd.f32 %v1072, %v1073
        %v1075 = vrot.slane %v1074, 2
        %v1076 = vadd.f32 %v1074, %v1075
        %v1077 = vrot.slane %v1076, 1
        %v1078 = vadd.f32 %v1076, %v1077
        %v1079 = vrcp.pop %v1041
        %v1080 = vmul.f32 256.0, %v1079
        %v1081 = vrcp.pop %v1078
        %v1082 = vmul.f32 256.0, %v1081
        %v1083 = vmul.f32 %v878, %v1080
        %v1084 = vmul.f32 %v880, %v1082
        %v1085 = vmul.f32 %v882, %v1080
        %v1086 = vmul.f32 %v884, %v1082
        %v1087 = vmul.f32 %v886, %v1080
        %v1088 = vmul.f32 %v888, %v1082
        %v1089 = vmul.f32 %v890, %v1080
        %v1090 = vmul.f32 %v892, %v1082
        %v1091 = vmul.f32 %v894, %v1080
        %v1092 = vmul.f32 %v896, %v1082
        %v1093 = vmul.f32 %v898, %v1080
        %v1094 = vmul.f32 %v900, %v1082
        %v1095 = vmul.f32 %v902, %v1080
        %v1096 = vmul.f32 %v904, %v1082
        %v1097 = vmul.f32 %v906, %v1080
        %v1098 = vmul.f32 %v908, %v1082
        %v1099 = vmul.f32 %v910, %v1080
        %v1100 = vmul.f32 %v912, %v1082
        %v1101 = vmul.f32 %v914, %v1080
        %v1102 = vmul.f32 %v916, %v1082
        %v1103 = vmul.f32 %v918, %v1080
        %v1104 = vmul.f32 %v920, %v1082
        %v1105 = vmul.f32 %v922, %v1080
        %v1106 = vmul.f32 %v924, %v1082
        %v1107 = vmul.f32 %v926, %v1080
        %v1108 = vmul.f32 %v928, %v1082
        %v1109 = vmul.f32 %v930, %v1080
        %v1110 = vmul.f32 %v932, %v1082
        %v1111 = vmul.f32 %v934, %v1080
        %v1112 = vmul.f32 %v936, %v1082
        %v1113 = vmul.f32 %v938, %v1080
        %v1114 = vmul.f32 %v940, %v1082
        %v1115 = vmul.f32 %v942, %v1080
        %v1116 = vmul.f32 %v944, %v1082
        %v1117 = vmul.f32 %v946, %v1080
        %v1118 = vmul.f32 %v948, %v1082
        %v1119 = vmul.f32 %v950, %v1080
        %v1120 = vmul.f32 %v952, %v1082
        %v1121 = vmul.f32 %v954, %v1080
        %v1122 = vmul.f32 %v956, %v1082
        %v1123 = vmul.f32 %v958, %v1080
        %v1124 = vmul.f32 %v960, %v1082
        %v1125 = vmul.f32 %v962, %v1080
        %v1126 = vmul.f32 %v964, %v1082
        %v1127 = vmul.f32 %v966, %v1080
        %v1128 = vmul.f32 %v968, %v1082
        %v1129 = vmul.f32 %v970, %v1080
        %v1130 = vmul.f32 %v972, %v1082
        %v1131 = vmul.f32 %v974, %v1080
        %v1132 = vmul.f32 %v976, %v1082
        %v1133 = vmul.f32 %v978, %v1080
        %v1134 = vmul.f32 %v980, %v1082
        %v1135 = vmul.f32 %v982, %v1080
        %v1136 = vmul.f32 %v984, %v1082
        %v1137 = vmul.f32 %v986, %v1080
        %v1138 = vmul.f32 %v988, %v1082
        %v1139 = vmul.f32 %v990, %v1080
        %v1140 = vmul.f32 %v992, %v1082
        %v1141 = vmul.f32 %v994, %v1080
        %v1142 = vmul.f32 %v996, %v1082
        %v1143 = vmul.f32 %v998, %v1080
        %v1144 = vmul.f32 %v1000, %v1082
        %v1145 = vmul.f32 %v1002, %v1080
        %v1146 = vmul.f32 %v1004, %v1082
        %v1147 = vpack.c.bf16 %v1085, %v1083
        %v1148 = vpack.c.bf16 %v1086, %v1084
        %v1149 = vpack.c.bf16 %v1089, %v1087
        %v1150 = vpack.c.bf16 %v1090, %v1088
        %v1151 = vpack.c.bf16 %v1093, %v1091
        %v1152 = vpack.c.bf16 %v1094, %v1092
        %v1153 = vpack.c.bf16 %v1097, %v1095
        %v1154 = vpack.c.bf16 %v1098, %v1096
        %v1155 = vpack.c.bf16 %v1101, %v1099
        %v1156 = vpack.c.bf16 %v1102, %v1100
        %v1157 = vpack.c.bf16 %v1105, %v1103
        %v1158 = vpack.c.bf16 %v1106, %v1104
        %v1159 = vpack.c.bf16 %v1109, %v1107
        %v1160 = vpack.c.bf16 %v1110, %v1108
        %v1161 = vpack.c.bf16 %v1113, %v1111
        %v1162 = vpack.c.bf16 %v1114, %v1112
        %v1163 = vpack.c.bf16 %v1117, %v1115
        %v1164 = vpack.c.bf16 %v1118, %v1116
        %v1165 = vpack.c.bf16 %v1121, %v1119
        %v1166 = vpack.c.bf16 %v1122, %v1120
        %v1167 = vpack.c.bf16 %v1125, %v1123
        %v1168 = vpack.c.bf16 %v1126, %v1124
        %v1169 = vpack.c.bf16 %v1129, %v1127
        %v1170 = vpack.c.bf16 %v1130, %v1128
        %v1171 = vpack.c.bf16 %v1133, %v1131
        %v1172 = vpack.c.bf16 %v1134, %v1132
        %v1173 = vpack.c.bf16 %v1137, %v1135
        %v1174 = vpack.c.bf16 %v1138, %v1136
        %v1175 = vpack.c.bf16 %v1141, %v1139
        %v1176 = vpack.c.bf16 %v1142, %v1140
        %v1177 = vpack.c.bf16 %v1145, %v1143
        %v1178 = vpack.c.bf16 %v1146, %v1144
        %1179 = vst [vmem:[#allocation2] sm:$0xff] %v1147
        %1180 = vst [vmem:[#allocation2 + $0x8] sm:$0xff] %v1148
        %1181 = vst [vmem:[#allocation2 + $0x10] sm:$0xff] %v1149
        %1182 = vst [vmem:[#allocation2 + $0x18] sm:$0xff] %v1150
        %1183 = vst [vmem:[#allocation2 + $0x20] sm:$0xff] %v1151
        %1184 = vst [vmem:[#allocation2 + $0x28] sm:$0xff] %v1152
        %1185 = vst [vmem:[#allocation2 + $0x30] sm:$0xff] %v1153
        %1186 = vst [vmem:[#allocation2 + $0x38] sm:$0xff] %v1154
        %1187 = vst [vmem:[#allocation2 + $0x40] sm:$0xff] %v1155
        %1188 = vst [vmem:[#allocation2 + $0x48] sm:$0xff] %v1156
        %1189 = vst [vmem:[#allocation2 + $0x50] sm:$0xff] %v1157
        %1190 = vst [vmem:[#allocation2 + $0x58] sm:$0xff] %v1158
        %1191 = vst [vmem:[#allocation2 + $0x60] sm:$0xff] %v1159
        %1192 = vst [vmem:[#allocation2 + $0x68] sm:$0xff] %v1160
        %1193 = vst [vmem:[#allocation2 + $0x70] sm:$0xff] %v1161
        %1194 = vst [vmem:[#allocation2 + $0x78] sm:$0xff] %v1162
        %1195 = vst [vmem:[#allocation2 + $0x80] sm:$0xff] %v1163
        %1196 = vst [vmem:[#allocation2 + $0x88] sm:$0xff] %v1164
        %1197 = vst [vmem:[#allocation2 + $0x90] sm:$0xff] %v1165
        %1198 = vst [vmem:[#allocation2 + $0x98] sm:$0xff] %v1166
        %1199 = vst [vmem:[#allocation2 + $0xa0] sm:$0xff] %v1167
        %1200 = vst [vmem:[#allocation2 + $0xa8] sm:$0xff] %v1168
        %1201 = vst [vmem:[#allocation2 + $0xb0] sm:$0xff] %v1169
        %1202 = vst [vmem:[#allocation2 + $0xb8] sm:$0xff] %v1170
        %1203 = vst [vmem:[#allocation2 + $0xc0] sm:$0xff] %v1171
        %1204 = vst [vmem:[#allocation2 + $0xc8] sm:$0xff] %v1172
        %1205 = vst [vmem:[#allocation2 + $0xd0] sm:$0xff] %v1173
        %1206 = vst [vmem:[#allocation2 + $0xd8] sm:$0xff] %v1174
        %1207 = vst [vmem:[#allocation2 + $0xe0] sm:$0xff] %v1175
        %1208 = vst [vmem:[#allocation2 + $0xe8] sm:$0xff] %v1176
        %1209 = vst [vmem:[#allocation2 + $0xf0] sm:$0xff] %v1177
        %1210 = vst [vmem:[#allocation2 + $0xf8] sm:$0xff] %v1178
        %v1211 = vpack.c.bf16 %v294, %v288
        %v1212 = vpack.c.bf16 %v296, %v290
        %v1213 = vpack.c.bf16 %v306, %v300
        %v1214 = vpack.c.bf16 %v308, %v302
        %v1215 = vld [vmem:[#allocation2] sm:$0xff]
        %v1216 = vld [vmem:[#allocation2 + $0x8] sm:$0xff]
        %v1217 = vld [vmem:[#allocation2 + $0x10] sm:$0xff]
        %v1218 = vld [vmem:[#allocation2 + $0x18] sm:$0xff]
        %v1219 = vld [vmem:[#allocation2 + $0x20] sm:$0xff]
        %v1220 = vld [vmem:[#allocation2 + $0x28] sm:$0xff]
        %v1221 = vld [vmem:[#allocation2 + $0x30] sm:$0xff]
        %v1222 = vld [vmem:[#allocation2 + $0x38] sm:$0xff]
        %v1223 = vld [vmem:[#allocation2 + $0x40] sm:$0xff]
        %v1224 = vld [vmem:[#allocation2 + $0x48] sm:$0xff]
        %v1225 = vld [vmem:[#allocation2 + $0x50] sm:$0xff]
        %v1226 = vld [vmem:[#allocation2 + $0x58] sm:$0xff]
        %v1227 = vld [vmem:[#allocation2 + $0x60] sm:$0xff]
        %v1228 = vld [vmem:[#allocation2 + $0x68] sm:$0xff]
        %v1229 = vld [vmem:[#allocation2 + $0x70] sm:$0xff]
        %v1230 = vld [vmem:[#allocation2 + $0x78] sm:$0xff]
        %v1231 = vld [vmem:[#allocation2 + $0x80] sm:$0xff]
        %v1232 = vld [vmem:[#allocation2 + $0x88] sm:$0xff]
        %v1233 = vld [vmem:[#allocation2 + $0x90] sm:$0xff]
        %v1234 = vld [vmem:[#allocation2 + $0x98] sm:$0xff]
        %v1235 = vld [vmem:[#allocation2 + $0xa0] sm:$0xff]
        %v1236 = vld [vmem:[#allocation2 + $0xa8] sm:$0xff]
        %v1237 = vld [vmem:[#allocation2 + $0xb0] sm:$0xff]
        %v1238 = vld [vmem:[#allocation2 + $0xb8] sm:$0xff]
        %v1239 = vld [vmem:[#allocation2 + $0xc0] sm:$0xff]
        %v1240 = vld [vmem:[#allocation2 + $0xc8] sm:$0xff]
        %v1241 = vld [vmem:[#allocation2 + $0xd0] sm:$0xff]
        %v1242 = vld [vmem:[#allocation2 + $0xd8] sm:$0xff]
        %v1243 = vld [vmem:[#allocation2 + $0xe0] sm:$0xff]
        %v1244 = vld [vmem:[#allocation2 + $0xe8] sm:$0xff]
        %v1245 = vld [vmem:[#allocation2 + $0xf0] sm:$0xff]
        %v1246 = vld [vmem:[#allocation2 + $0xf8] sm:$0xff]
        %1247 = vmatprep.subr.bf16.mxu0 %v1216
        %1248 = vmatpush1.bf16.msra.mxu0 %v1215
        %1249 = vmatprep.subr.bf16.mxu0 %v1218
        %1250 = vmatpush1.bf16.msra.mxu0 %v1217
        %1251 = vmatprep.subr.bf16.mxu0 %v1220
        %1252 = vmatpush1.bf16.msra.mxu0 %v1219
        %1253 = vmatprep.subr.bf16.mxu0 %v1222
        %1254 = vmatpush1.bf16.msra.mxu0 %v1221
        %1255 = vmatprep.subr.bf16.mxu0 %v1224
        %1256 = vmatpush1.bf16.msra.mxu0 %v1223
        %1257 = vmatprep.subr.bf16.mxu0 %v1226
        %1258 = vmatpush1.bf16.msra.mxu0 %v1225
        %1259 = vmatprep.subr.bf16.mxu0 %v1228
        %1260 = vmatpush1.bf16.msra.mxu0 %v1227
        %1261 = vmatprep.subr.bf16.mxu0 %v1230
        %1262 = vmatpush1.bf16.msra.mxu0 %v1229
        %1263 = vmatprep.subr.bf16.mxu0 %v1232
        %1264 = vmatpush1.bf16.msra.mxu0 %v1231
        %1265 = vmatprep.subr.bf16.mxu0 %v1234
        %1266 = vmatpush1.bf16.msra.mxu0 %v1233
        %1267 = vmatprep.subr.bf16.mxu0 %v1236
        %1268 = vmatpush1.bf16.msra.mxu0 %v1235
        %1269 = vmatprep.subr.bf16.mxu0 %v1238
        %1270 = vmatpush1.bf16.msra.mxu0 %v1237
        %1271 = vmatprep.subr.bf16.mxu0 %v1240
        %1272 = vmatpush1.bf16.msra.mxu0 %v1239
        %1273 = vmatprep.subr.bf16.mxu0 %v1242
        %1274 = vmatpush1.bf16.msra.mxu0 %v1241
        %1275 = vmatprep.subr.bf16.mxu0 %v1244
        %1276 = vmatpush1.bf16.msra.mxu0 %v1243
        %1277 = vmatprep.subr.bf16.mxu0 %v1246
        %1278 = vmatpush1.bf16.msra.mxu0 %v1245
        %1279 = vmatprep.mubr.bf16.mxu0 %v1212
        %1280 = vmatmul.mubr.bf16.gmra.mrb[0].mxu0 %v1211
        %v1281 = vpop.f32.mrb[0].mxu0
        %v1282 = vadd.f32 0.0, %v1281
        %v1283 = vpop.f32.mrb[0].mxu0
        %v1284 = vadd.f32 0.0, %v1283
        %v1285 = vpop.f32.mrb[0].mxu0
        %v1286 = vadd.f32 0.0, %v1285
        %v1287 = vpop.f32.mrb[0].mxu0
        %v1288 = vadd.f32 0.0, %v1287
        %1289 = vmatprep.mubr.bf16.mxu0 %v1214
        %1290 = vmatmul.mubr.bf16.gmra.mrb[0].mxu0 %v1213
        %v1291 = vpop.f32.mrb[0].mxu0
        %v1292 = vadd.f32 0.0, %v1291
        %v1293 = vpop.f32.mrb[0].mxu0
        %v1294 = vadd.f32 0.0, %v1293
        %v1295 = vpop.f32.mrb[0].mxu0
        %v1296 = vadd.f32 0.0, %v1295
        %v1297 = vpop.f32.mrb[0].mxu0
        %v1298 = vadd.f32 0.0, %v1297
        %1299 = vdwg.mxu0
        %s1300 = sld [smem:[#allocation5]]
        %v1301 = vstv %s1300
        %v1302 = vmul.f32 %v1301, %v1282
        %v1303 = vmul.f32 %v1301, %v1284
        %v1304 = vmul.f32 %v1301, %v1286
        %v1305 = vmul.f32 %v1301, %v1288
        %v1306 = vmul.f32 %v1301, %v1292
        %v1307 = vmul.f32 %v1301, %v1294
        %v1308 = vmul.f32 %v1301, %v1296
        %v1309 = vmul.f32 %v1301, %v1298
        %v1310 = vadd.f32 %v1302, %v177
        %v1311 = vadd.f32 %v1303, %v178
        %v1312 = vadd.f32 %v1304, %v179
        %v1313 = vadd.f32 %v1305, %v180
        %v1314 = vadd.f32 %v1306, %v181
        %v1315 = vadd.f32 %v1307, %v182
        %v1316 = vadd.f32 %v1308, %v183
        %v1317 = vadd.f32 %v1309, %v184
        %1318 = vst [vmem:[%s171] sm:$0xff] %v1310
        %1319 = vst [vmem:[%s171 + $0x8] sm:$0xff] %v1311
        %1320 = vst [vmem:[%s171 + $0x10] sm:$0xff] %v1312
        %1321 = vst [vmem:[%s171 + $0x18] sm:$0xff] %v1313
        %1322 = vst [vmem:[%s171 + $0x20] sm:$0xff] %v1314
        %1323 = vst [vmem:[%s171 + $0x28] sm:$0xff] %v1315
        %1324 = vst [vmem:[%s171 + $0x30] sm:$0xff] %v1316
        %1325 = vst [vmem:[%s171 + $0x38] sm:$0xff] %v1317
        %s1326 = sld [smem:[#allocation4 + %s25]]
        %v1327 = vlaneseq
        %v1328 = vshrl.u32 %v1327, 7
        %v1329 = vadd.s32 %v1328, 8
        %v1330 = vadd.s32 %v1328, 16
        %v1331 = vadd.s32 %v1328, 24
        %v1332 = vadd.s32 %v1328, 32
        %v1333 = vadd.s32 %v1328, 40
        %v1334 = vadd.s32 %v1328, 48
        %v1335 = vadd.s32 %v1328, 56
        %v1336 = vadd.s32 %v1328, 64
        %v1337 = vadd.s32 %v1328, 72
        %v1338 = vadd.s32 %v1328, 80
        %v1339 = vadd.s32 %v1328, 88
        %v1340 = vadd.s32 %v1328, 96
        %v1341 = vadd.s32 %v1328, 104
        %v1342 = vadd.s32 %v1328, 112
        %v1343 = vadd.s32 %v1328, 120
        %v1344 = vadd.s32 %v1328, 128
        %v1345 = vadd.s32 %v1328, 136
        %v1346 = vadd.s32 %v1328, 144
        %v1347 = vadd.s32 %v1328, 152
        %v1348 = vadd.s32 %v1328, 160
        %v1349 = vadd.s32 %v1328, 168
        %v1350 = vadd.s32 %v1328, 176
        %v1351 = vadd.s32 %v1328, 184
        %v1352 = vadd.s32 %v1328, 192
        %v1353 = vadd.s32 %v1328, 200
        %v1354 = vadd.s32 %v1328, 208
        %v1355 = vadd.s32 %v1328, 216
        %v1356 = vadd.s32 %v1328, 224
        %v1357 = vadd.s32 %v1328, 232
        %v1358 = vadd.s32 %v1328, 240
        %v1359 = vadd.s32 %v1328, 248
        %v1360 = vlaneseq
        %v1361 = vand.u32 %v1360, 127
        %v1362 = vadd.s32 %v1361, 128
        %v1363 = vstv %s1326
        %vm1364 = vcmp.eq.s32.totalorder %v1328, %v1363
        %vm1365 = vcmp.eq.s32.totalorder %v1329, %v1363
        %vm1366 = vcmp.eq.s32.totalorder %v1330, %v1363
        %vm1367 = vcmp.eq.s32.totalorder %v1331, %v1363
        %vm1368 = vcmp.eq.s32.totalorder %v1332, %v1363
        %vm1369 = vcmp.eq.s32.totalorder %v1333, %v1363
        %vm1370 = vcmp.eq.s32.totalorder %v1334, %v1363
        %vm1371 = vcmp.eq.s32.totalorder %v1335, %v1363
        %vm1372 = vcmp.eq.s32.totalorder %v1336, %v1363
        %vm1373 = vcmp.eq.s32.totalorder %v1337, %v1363
        %vm1374 = vcmp.eq.s32.totalorder %v1338, %v1363
        %vm1375 = vcmp.eq.s32.totalorder %v1339, %v1363
        %vm1376 = vcmp.eq.s32.totalorder %v1340, %v1363
        %vm1377 = vcmp.eq.s32.totalorder %v1341, %v1363
        %vm1378 = vcmp.eq.s32.totalorder %v1342, %v1363
        %vm1379 = vcmp.eq.s32.totalorder %v1343, %v1363
        %vm1380 = vcmp.eq.s32.totalorder %v1344, %v1363
        %vm1381 = vcmp.eq.s32.totalorder %v1345, %v1363
        %vm1382 = vcmp.eq.s32.totalorder %v1346, %v1363
        %vm1383 = vcmp.eq.s32.totalorder %v1347, %v1363
        %vm1384 = vcmp.eq.s32.totalorder %v1348, %v1363
        %vm1385 = vcmp.eq.s32.totalorder %v1349, %v1363
        %vm1386 = vcmp.eq.s32.totalorder %v1350, %v1363
        %vm1387 = vcmp.eq.s32.totalorder %v1351, %v1363
        %vm1388 = vcmp.eq.s32.totalorder %v1352, %v1363
        %vm1389 = vcmp.eq.s32.totalorder %v1353, %v1363
        %vm1390 = vcmp.eq.s32.totalorder %v1354, %v1363
        %vm1391 = vcmp.eq.s32.totalorder %v1355, %v1363
        %vm1392 = vcmp.eq.s32.totalorder %v1356, %v1363
        %vm1393 = vcmp.eq.s32.totalorder %v1357, %v1363
        %vm1394 = vcmp.eq.s32.totalorder %v1358, %v1363
        %vm1395 = vcmp.eq.s32.totalorder %v1359, %v1363
        %v1396 = vunpack.c.l.bf16 %v1147
        %v1397 = vunpack.c.h.bf16 %v1147
        %v1398 = vunpack.c.l.bf16 %v1149
        %v1399 = vunpack.c.h.bf16 %v1149
        %v1400 = vunpack.c.l.bf16 %v1151
        %v1401 = vunpack.c.h.bf16 %v1151
        %v1402 = vunpack.c.l.bf16 %v1153
        %v1403 = vunpack.c.h.bf16 %v1153
        %v1404 = vunpack.c.l.bf16 %v1155
        %v1405 = vunpack.c.h.bf16 %v1155
        %v1406 = vunpack.c.l.bf16 %v1157
        %v1407 = vunpack.c.h.bf16 %v1157
        %v1408 = vunpack.c.l.bf16 %v1159
        %v1409 = vunpack.c.h.bf16 %v1159
        %v1410 = vunpack.c.l.bf16 %v1161
        %v1411 = vunpack.c.h.bf16 %v1161
        %v1412 = vunpack.c.l.bf16 %v1163
        %v1413 = vunpack.c.h.bf16 %v1163
        %v1414 = vunpack.c.l.bf16 %v1165
        %v1415 = vunpack.c.h.bf16 %v1165
        %v1416 = vunpack.c.l.bf16 %v1167
        %v1417 = vunpack.c.h.bf16 %v1167
        %v1418 = vunpack.c.l.bf16 %v1169
        %v1419 = vunpack.c.h.bf16 %v1169
        %v1420 = vunpack.c.l.bf16 %v1171
        %v1421 = vunpack.c.h.bf16 %v1171
        %v1422 = vunpack.c.l.bf16 %v1173
        %v1423 = vunpack.c.h.bf16 %v1173
        %v1424 = vunpack.c.l.bf16 %v1175
        %v1425 = vunpack.c.h.bf16 %v1175
        %v1426 = vunpack.c.l.bf16 %v1177
        %v1427 = vunpack.c.h.bf16 %v1177
        %v1428 = vsel %vm1364, %v1396, 0.0
        %v1429 = vsel %vm1365, %v1397, 0.0
        %v1430 = vsel %vm1366, %v1398, 0.0
        %v1431 = vsel %vm1367, %v1399, 0.0
        %v1432 = vsel %vm1368, %v1400, 0.0
        %v1433 = vsel %vm1369, %v1401, 0.0
        %v1434 = vsel %vm1370, %v1402, 0.0
        %v1435 = vsel %vm1371, %v1403, 0.0
        %v1436 = vsel %vm1372, %v1404, 0.0
        %v1437 = vsel %vm1373, %v1405, 0.0
        %v1438 = vsel %vm1374, %v1406, 0.0
        %v1439 = vsel %vm1375, %v1407, 0.0
        %v1440 = vsel %vm1376, %v1408, 0.0
        %v1441 = vsel %vm1377, %v1409, 0.0
        %v1442 = vsel %vm1378, %v1410, 0.0
        %v1443 = vsel %vm1379, %v1411, 0.0
        %v1444 = vsel %vm1380, %v1412, 0.0
        %v1445 = vsel %vm1381, %v1413, 0.0
        %v1446 = vsel %vm1382, %v1414, 0.0
        %v1447 = vsel %vm1383, %v1415, 0.0
        %v1448 = vsel %vm1384, %v1416, 0.0
        %v1449 = vsel %vm1385, %v1417, 0.0
        %v1450 = vsel %vm1386, %v1418, 0.0
        %v1451 = vsel %vm1387, %v1419, 0.0
        %v1452 = vsel %vm1388, %v1420, 0.0
        %v1453 = vsel %vm1389, %v1421, 0.0
        %v1454 = vsel %vm1390, %v1422, 0.0
        %v1455 = vsel %vm1391, %v1423, 0.0
        %v1456 = vsel %vm1392, %v1424, 0.0
        %v1457 = vsel %vm1393, %v1425, 0.0
        %v1458 = vsel %vm1394, %v1426, 0.0
        %v1459 = vsel %vm1395, %v1427, 0.0
        %vm1460 = vcmask 7168
        %v1461 = vsel %vm1460, %v1428, 0.0
        %v1462 = vsel %vm1460, %v1429, 0.0
        %v1463 = vadd.f32 %v1461, %v1462
        %v1464 = vsel %vm1460, %v1430, 0.0
        %v1465 = vadd.f32 %v1463, %v1464
        %v1466 = vsel %vm1460, %v1431, 0.0
        %v1467 = vadd.f32 %v1465, %v1466
        %v1468 = vsel %vm1460, %v1432, 0.0
        %v1469 = vadd.f32 %v1467, %v1468
        %v1470 = vsel %vm1460, %v1433, 0.0
        %v1471 = vadd.f32 %v1469, %v1470
        %v1472 = vsel %vm1460, %v1434, 0.0
        %v1473 = vadd.f32 %v1471, %v1472
        %v1474 = vsel %vm1460, %v1435, 0.0
        %v1475 = vadd.f32 %v1473, %v1474
        %v1476 = vsel %vm1460, %v1436, 0.0
        %v1477 = vadd.f32 %v1475, %v1476
        %v1478 = vsel %vm1460, %v1437, 0.0
        %v1479 = vadd.f32 %v1477, %v1478
        %v1480 = vsel %vm1460, %v1438, 0.0
        %v1481 = vadd.f32 %v1479, %v1480
        %v1482 = vsel %vm1460, %v1439, 0.0
        %v1483 = vadd.f32 %v1481, %v1482
        %v1484 = vsel %vm1460, %v1440, 0.0
        %v1485 = vadd.f32 %v1483, %v1484
        %v1486 = vsel %vm1460, %v1441, 0.0
        %v1487 = vadd.f32 %v1485, %v1486
        %v1488 = vsel %vm1460, %v1442, 0.0
        %v1489 = vadd.f32 %v1487, %v1488
        %v1490 = vsel %vm1460, %v1443, 0.0
        %v1491 = vadd.f32 %v1489, %v1490
        %v1492 = vsel %vm1460, %v1444, 0.0
        %v1493 = vadd.f32 %v1491, %v1492
        %v1494 = vsel %vm1460, %v1445, 0.0
        %v1495 = vadd.f32 %v1493, %v1494
        %v1496 = vsel %vm1460, %v1446, 0.0
        %v1497 = vadd.f32 %v1495, %v1496
        %v1498 = vsel %vm1460, %v1447, 0.0
        %v1499 = vadd.f32 %v1497, %v1498
        %v1500 = vsel %vm1460, %v1448, 0.0
        %v1501 = vadd.f32 %v1499, %v1500
        %v1502 = vsel %vm1460, %v1449, 0.0
        %v1503 = vadd.f32 %v1501, %v1502
        %v1504 = vsel %vm1460, %v1450, 0.0
        %v1505 = vadd.f32 %v1503, %v1504
        %v1506 = vsel %vm1460, %v1451, 0.0
        %v1507 = vadd.f32 %v1505, %v1506
        %v1508 = vsel %vm1460, %v1452, 0.0
        %v1509 = vadd.f32 %v1507, %v1508
        %v1510 = vsel %vm1460, %v1453, 0.0
        %v1511 = vadd.f32 %v1509, %v1510
        %v1512 = vsel %vm1460, %v1454, 0.0
        %v1513 = vadd.f32 %v1511, %v1512
        %v1514 = vsel %vm1460, %v1455, 0.0
        %v1515 = vadd.f32 %v1513, %v1514
        %v1516 = vsel %vm1460, %v1456, 0.0
        %v1517 = vadd.f32 %v1515, %v1516
        %v1518 = vsel %vm1460, %v1457, 0.0
        %v1519 = vadd.f32 %v1517, %v1518
        %v1520 = vsel %vm1460, %v1458, 0.0
        %v1521 = vadd.f32 %v1519, %v1520
        %v1522 = vsel %vm1460, %v1459, 0.0
        %v1523 = vadd.f32 %v1521, %v1522
        %1524 = vadd.xlane.f32.xlu0 %v1523
        %v1525 = vpop.xlane.xlu0 %1524
        %v1526 = vrot.slane %v1525, 4
        %v1527 = vadd.f32 %v1525, %v1526
        %v1528 = vrot.slane %v1527, 2
        %v1529 = vadd.f32 %v1527, %v1528
        %v1530 = vrot.slane %v1529, 1
        %v1531 = vadd.f32 %v1529, %v1530
        %s1532 = vtos %v1531
        %vm1533 = vcmp.eq.s32.totalorder %v1361, %v1363
        %vm1534 = vcmp.eq.s32.totalorder %v1362, %v1363
        %v1535 = vunpack.c.l.bf16 %v1211
        %v1536 = vunpack.c.l.bf16 %v1212
        %v1537 = vunpack.c.h.bf16 %v1211
        %v1538 = vunpack.c.h.bf16 %v1212
        %v1539 = vunpack.c.l.bf16 %v1213
        %v1540 = vunpack.c.l.bf16 %v1214
        %v1541 = vunpack.c.h.bf16 %v1213
        %v1542 = vunpack.c.h.bf16 %v1214
        %v1543 = vsel %vm1533, 1, 0
        %v1544 = vsel %vm1534, 1, 0
        %vm1545 = vcmp.eq.s32.totalorder %v1543, 1
        %vm1546 = vcmp.eq.s32.totalorder %v1544, 1
        %v1547 = vsel %vm1545, %v1535, 0.0
        %v1548 = vsel %vm1546, %v1536, 0.0
        %v1549 = vsel %vm1545, %v1537, 0.0
        %v1550 = vsel %vm1546, %v1538, 0.0
        %v1551 = vsel %vm1545, %v1539, 0.0
        %v1552 = vsel %vm1546, %v1540, 0.0
        %v1553 = vsel %vm1545, %v1541, 0.0
        %v1554 = vsel %vm1546, %v1542, 0.0
        %v1555 = vadd.f32 %v1547, %v1548
        %1556 = vadd.xlane.f32.xlu0 %v1555
        %v1557 = vpop.xlane.xlu0 %1556
        %v1558 = vadd.f32 %v1549, %v1550
        %1559 = vadd.xlane.f32.xlu0 %v1558
        %v1560 = vpop.xlane.xlu0 %1559
        %v1561 = vadd.f32 %v1551, %v1552
        %1562 = vadd.xlane.f32.xlu0 %v1561
        %v1563 = vpop.xlane.xlu0 %1562
        %v1564 = vadd.f32 %v1553, %v1554
        %1565 = vadd.xlane.f32.xlu0 %v1564
        %v1566 = vpop.xlane.xlu0 %1565
        %v1567 = vstv %s1532
        %v1568 = vmul.f32 %v1567, %v1557
        %v1569 = vmul.f32 %v1567, %v1560
        %v1570 = vmul.f32 %v1567, %v1563
        %v1571 = vmul.f32 %v1567, %v1566
        %v1572 = vmul.f32 %v1301, %v1568
        %v1573 = vmul.f32 %v1301, %v1569
        %v1574 = vmul.f32 %v1301, %v1570
        %v1575 = vmul.f32 %v1301, %v1571
        %v1576 = vsub.f32 %v1310, %v1572
        %v1577 = vsub.f32 %v1312, %v1573
        %v1578 = vsub.f32 %v1314, %v1574
        %v1579 = vsub.f32 %v1316, %v1575
        %1580 = vst.msk [vmem:[%s171] sm:$0xff] %vm1460, %v1576
        %1581 = vst.msk [vmem:[%s171 + $0x10] sm:$0xff] %vm1460, %v1577
        %1582 = vst.msk [vmem:[%s171 + $0x20] sm:$0xff] %vm1460, %v1578
        %1583 = vst.msk [vmem:[%s171 + $0x30] sm:$0xff] %vm1460, %v1579
        %s1584 = sand.u32 %s101, 1
        %s1585 = scalar_lea.sflag [#allocation7], %s1584
        %s1586 = sand.u32 %s101, 1
        %s1587 = smul.addr %s1586, 64
        %s1588 = scalar_lea.vmem [#allocation6], %s1587
        // Predicated region
        $region33: #{tpu_custom_call.1} parent=31 // pred_check
          %p1589 = pneg %p111
        $region34: #{tpu_custom_call.1} parent=31 // pred_check_branch
          %1591 = sbr.rel (%p1589) target = $region36
        $region35: #{tpu_custom_call.1} parent=31 // pred_region
          %s1593 = ssub.s32 1024, 1024
          %1594 = vsyncadd %s1585, %s1593
          %s1595 = smul.addr %s25, 8
          %s1596 = smul.addr %s1595, 128
          %s1597 = scalar_lea.hbm %s4, %s1596
          %s1598 = sshll.u32 %s1588, 4
          %s1599 = int_to_ptr.vmem [resolvable:$true] %s1598
          %1604 = dma.vmem_to_hbm [thread:$0]  %s1599, 1024, %s1597, %s1585, 256, 256, 16
        $region36: #{tpu_custom_call.1} parent=31 // pred_fallthru
          _
      $region32: #{tpu_custom_call.1} parent=5 // pred_fallthru
        _
      %p1605 = scmp.le.s32.totalorder 2, %s20
      // Predicated region
      $region37: #{tpu_custom_call.1} parent=5 // pred_check
        %p1606 = pneg %p1605
      $region38: #{tpu_custom_call.1} parent=5 // pred_check_branch
        %1608 = sbr.rel (%p1606) target = $region40
      $region39: #{tpu_custom_call.1} parent=5 // pred_region
        %s1609 = ssub.s32 %s20, 2
        // Predicated region
        $region41: #{tpu_custom_call.1} parent=39 // pred_check
          %p1610 = pneg %p117
        $region42: #{tpu_custom_call.1} parent=39 // pred_check_branch
          %1612 = sbr.rel (%p1610) target = $region44
        $region43: #{tpu_custom_call.1} parent=39 // pred_region
          %s1613 = sand.u32 %s102, 1
          %s1614 = scalar_lea.sflag [#allocation7], %s1613
          %s1615 = sand.u32 %s102, 1
          %s1616 = smul.addr %s1615, 64
          %s1617 = scalar_lea.vmem [#allocation6], %s1616
          %1618 = dma.done %s1614, 1024
        $region44: #{tpu_custom_call.1} parent=39 // pred_fallthru
          _
      $region40: #{tpu_custom_call.1} parent=5 // pred_fallthru
        _
    $region6: #{tpu_custom_call.1} parent=1 // loop_footer
      %s24 = sadd.s32 1, %s20
    $region7: #{tpu_custom_call.1} parent=1 // loop_footer_branch
      %19 = sbr.rel target = $region3
    $region8: #{tpu_custom_call.1} parent=1 // loop_exit
      _
    %1619 = vsyncpa [#allocation7], 1
    %s1620 = scalar_lea.sflag [#allocation7], 1
    %1621 = vsyncpa %s1620, 1

</llo_original>
